<compile_context>
chip_gen: v7x
topology: tpu7x:2x2x1
jax: 0.10.0
libtpu: 0.0.40
codegen_flags: <defaults>
</compile_context>

<pallas_src>
import numpy as np
import jax
import jax.numpy as jnp
from jax.experimental import pallas as pl
from jax.experimental.pallas import tpu as pltpu

# ---------------- small synthetic sizes (consistent with the module) --------
B, C, H, W = 2, 16, 16, 16          # middle-layer feature map (C % RED == 0)
HW = H * W
RED = 8                             # ATTENTION_REDUCTION_RATIO
CR = C // RED
KS_INHIB = 5                        # LATERAL_INHIBITION_KERNEL_SIZE
INHIB_STRENGTH = 0.3                # INHIBITION_STRENGTH
KS_SPAT = 7                         # spatial-attention conv kernel
HID = 32                            # classifier hidden width (stand-in for 1024)
NUM_CLASSES = 10
BN_EPS = 1e-5


def _sigmoid(v):
    # exp goes to the EUP; the divide is a handful of vregs here.  This form
    # saturates correctly (exp overflow -> inf -> 1/(1+inf) = 0).
    return 1.0 / (1.0 + jnp.exp(-v))


# ---------------------------------------------------------------------------
# Fused kernel: BioInspiredBlock + avgpool + classifier head (single step)
# ---------------------------------------------------------------------------
def bio_cnn_kernel(scal_ref, x_ref, mdog_ref, w1_ref, b1_ref, w2_ref, b2_ref,
                   mspa_ref, mspm_ref, cw1_ref, cb1_ref, cw2_ref, cb2_ref,
                   out_ref):
    alpha   = scal_ref[0]            # LateralInhibition.alpha
    gamma   = scal_ref[1]            # BiologicalAttention.gamma
    mixing  = scal_ref[2]            # BioInspiredBlock.mixing
    sp_bias = scal_ref[3]            # spatial conv bias with BatchNorm folded in

    x2 = x_ref[...]                  # (B*C, HW)  lane-dense feature map
    x3 = x2.reshape(B, C, HW)

    # ---- LateralInhibition: depthwise 5x5 DoG conv as one MXU matmul -------
    conv = jnp.dot(x2, mdog_ref[...], preferred_element_type=jnp.float32)
    inhib_out = x3 + alpha * conv.reshape(B, C, HW)

    # ---- BiologicalAttention: channel attention (on raw x, as in PyTorch) --
    pooled = jnp.mean(x3, axis=-1)                       # AdaptiveAvgPool2d(1) -> (B, C)
    h1 = jnp.dot(pooled, w1_ref[...], preferred_element_type=jnp.float32) + b1_ref[...]
    h1 = jnp.maximum(h1, 0.0)                            # ReLU
    ca = _sigmoid(jnp.dot(h1, w2_ref[...], preferred_element_type=jnp.float32)
                  + b2_ref[...])                         # (B, C)
    feature_refined = x3 * ca[:, :, None]

    # ---- BiologicalAttention: spatial attention (7x7 conv on [avg, max]) ---
    avg_pool = jnp.mean(x3, axis=1)                      # (B, HW)
    max_pool = jnp.max(x3, axis=1)                       # (B, HW)
    sconv = (jnp.dot(avg_pool, mspa_ref[...], preferred_element_type=jnp.float32)
             + jnp.dot(max_pool, mspm_ref[...], preferred_element_type=jnp.float32)
             + sp_bias)
    sa = _sigmoid(sconv)             # BatchNorm2d(1) eval stats folded into mspa/mspm/sp_bias
    attn_out = x3 + gamma * (feature_refined * sa[:, None, :])

    # ---- BioInspiredBlock mixing --------------------------------------------
    g = _sigmoid(mixing)
    y = g * attn_out + (1.0 - g) * inhib_out             # (B, C, HW)

    # ---- AdaptiveAvgPool2d(1) + flatten + classifier head -------------------
    pooled_y = jnp.mean(y, axis=-1)                      # (B, C)
    h = jnp.dot(pooled_y, cw1_ref[...], preferred_element_type=jnp.float32) + cb1_ref[...]
    h = h * jnp.clip(h + 3.0, 0.0, 6.0) * (1.0 / 6.0)    # Hardswish
    # Dropout(p=0.2): identity at inference
    out_ref[...] = (jnp.dot(h, cw2_ref[...], preferred_element_type=jnp.float32)
                    + cb2_ref[...])


def bio_inspired_cnn_forward(x, params):
    # TODO(synk): MobileNetV3-Small feature layers before/after MIDDLE_LAYER
    # (pretrained torchvision weights) are skipped; x is the middle-layer map.
    x2 = x.reshape(B * C, HW)        # NCHW -> lane-dense (B*C, H*W), contiguous/free
    vmem = pl.BlockSpec(memory_space=pltpu.MemorySpace.VMEM)
    smem = pl.BlockSpec(memory_space=pltpu.MemorySpace.SMEM)
    return pl.pallas_call(
        bio_cnn_kernel,
        out_shape=jax.ShapeDtypeStruct((B, NUM_CLASSES), jnp.float32),
        in_specs=[smem,              # scalars (4,)
                  vmem,              # x2          (B*C, HW)
                  vmem,              # mdog        (HW, HW)
                  vmem, vmem,        # w1 (C,CR), b1 (1,CR)
                  vmem, vmem,        # w2 (CR,C), b2 (1,C)
                  vmem, vmem,        # mspa, mspm  (HW, HW) each
                  vmem, vmem,        # cw1 (C,HID), cb1 (1,HID)
                  vmem, vmem],       # cw2 (HID,NC), cb2 (1,NC)
        out_specs=vmem,
        compiler_params=pltpu.CompilerParams(vmem_limit_bytes=32 * 1024 * 1024),
    )(params["scal"], x2, params["mdog"], params["w1"], params["b1"],
      params["w2"], params["b2"], params["mspa"], params["mspm"],
      params["cw1"], params["cb1"], params["cw2"], params["cb2"])


# ---------------------------------------------------------------------------
# Parameter construction (deterministic, synthetic) + conv-as-matmul setup
# ---------------------------------------------------------------------------
def _conv2d_same_matrix(kern2d, h, w, pad):
    """(h*w, h*w) matrix M such that x_flat @ M == cross-correlation of the
    (h, w) image x with `kern2d`, zero padding `pad` (PyTorch Conv2d semantics,
    same kernel for every channel when used depthwise)."""
    k = kern2d.shape[0]
    m = np.zeros((h * w, h * w), np.float32)
    for oi in range(h):
        for oj in range(w):
            q = oi * w + oj
            for di in range(k):
                ii = oi + di - pad
                if ii < 0 or ii >= h:
                    continue
                for dj in range(k):
                    jj = oj + dj - pad
                    if jj < 0 or jj >= w:
                        continue
                    m[ii * w + jj, q] += kern2d[di, dj]
    return m


def make_params(key):
    ks = jax.random.split(key, 5)

    # --- DoG kernel exactly as LateralInhibition.init_dog_kernel -------------
    k = KS_INHIB
    center_sigma = k / 6.0
    surround_sigma = k / 3.0
    grid = np.linspace(-(k // 2), k // 2, k, dtype=np.float32)
    gx, gy = np.meshgrid(grid, grid, indexing="ij")
    dist = gx ** 2 + gy ** 2
    center = np.exp(-dist / (2 * center_sigma ** 2))
    surround = np.exp(-dist / (2 * surround_sigma ** 2))
    dog = center - INHIB_STRENGTH * surround
    dog = (dog / np.abs(dog).sum()).astype(np.float32)                 # (5, 5)
    mdog = jnp.asarray(_conv2d_same_matrix(dog, H, W, KS_INHIB // 2))  # (HW, HW)

    # --- channel-attention 1x1 convs (stored transposed vs Conv2d (out,in,1,1))
    w1 = (0.1 * jax.random.normal(ks[0], (C, CR))).astype(jnp.float32)
    b1 = jnp.zeros((1, CR), jnp.float32)
    w2 = (0.1 * jax.random.normal(ks[1], (CR, C))).astype(jnp.float32)
    b2 = jnp.zeros((1, C), jnp.float32)

    # --- spatial-attention 7x7 conv (in=2 [avg,max], out=1) + BatchNorm2d(1) -
    wsp = np.asarray(0.1 * jax.random.normal(ks[2], (2, KS_SPAT, KS_SPAT)),
                     dtype=np.float32)                   # matches weight[0, ci, di, dj]
    sp_conv_bias = 0.0
    bn_w, bn_b, bn_mean, bn_var = 1.0, 0.0, 0.0, 1.0     # eval-mode running stats
    bn_scale = bn_w / np.sqrt(bn_var + BN_EPS)
    mspa = jnp.asarray(_conv2d_same_matrix(wsp[0], H, W, KS_SPAT // 2) * bn_scale)
    mspm = jnp.asarray(_conv2d_same_matrix(wsp[1], H, W, KS_SPAT // 2) * bn_scale)
    sp_bias = float((sp_conv_bias - bn_mean) * bn_scale + bn_b)

    # --- scalars: [alpha, gamma, mixing, folded spatial bias] -----------------
    scal = jnp.array([1.0, 1.0, 0.5, sp_bias], jnp.float32)

    # --- classifier: Linear(C, HID) -> Hardswish -> Dropout -> Linear(HID, 10)
    cw1 = (0.1 * jax.random.normal(ks[3], (C, HID))).astype(jnp.float32)
    cb1 = jnp.zeros((1, HID), jnp.float32)
    cw2 = (0.1 * jax.random.normal(ks[4], (HID, NUM_CLASSES))).astype(jnp.float32)
    cb2 = jnp.zeros((1, NUM_CLASSES), jnp.float32)

    return dict(scal=scal, mdog=mdog, w1=w1, b1=b1, w2=w2, b2=b2,
                mspa=mspa, mspm=mspm, cw1=cw1, cb1=cb1, cw2=cw2, cb2=cb2)


if __name__ == "__main__":
    key = jax.random.PRNGKey(0)
    kx, kp = jax.random.split(key)
    x = jax.random.normal(kx, (B, C, H, W), dtype=jnp.float32)  # middle-layer feature map
    params = make_params(kp)

    logits = jax.jit(bio_inspired_cnn_forward)(x, params)
    jax.block_until_ready(logits)
    assert logits.shape == (B, NUM_CLASSES)
    print("KERNEL_OK")
</pallas_src>

<mosaic_0001>
module attributes {stable_mosaic.version = 11 : i64} {
  func.func @bio_cnn_kernel(%arg0: memref<4xf32, #tpu.memory_space<smem>>, %arg1: memref<32x256xf32, #tpu.memory_space<vmem>>, %arg2: memref<256x256xf32, #tpu.memory_space<vmem>>, %arg3: memref<16x2xf32, #tpu.memory_space<vmem>>, %arg4: memref<1x2xf32, #tpu.memory_space<vmem>>, %arg5: memref<2x16xf32, #tpu.memory_space<vmem>>, %arg6: memref<1x16xf32, #tpu.memory_space<vmem>>, %arg7: memref<256x256xf32, #tpu.memory_space<vmem>>, %arg8: memref<256x256xf32, #tpu.memory_space<vmem>>, %arg9: memref<16x32xf32, #tpu.memory_space<vmem>>, %arg10: memref<1x32xf32, #tpu.memory_space<vmem>>, %arg11: memref<32x10xf32, #tpu.memory_space<vmem>>, %arg12: memref<1x10xf32, #tpu.memory_space<vmem>>, %arg13: memref<2x10xf32, #tpu.memory_space<vmem>>) attributes {dimension_semantics = [], scalar_prefetch = 0 : i64, scratch_operands = 0 : i64, tpu.core_type = #tpu.core_type<tc>} {
    %c0 = arith.constant 0 : index
    %0 = memref.load %arg0[%c0] : memref<4xf32, #tpu.memory_space<smem>>
    %c1 = arith.constant 1 : index
    %1 = memref.load %arg0[%c1] : memref<4xf32, #tpu.memory_space<smem>>
    %c2 = arith.constant 2 : index
    %2 = memref.load %arg0[%c2] : memref<4xf32, #tpu.memory_space<smem>>
    %c3 = arith.constant 3 : index
    %3 = memref.load %arg0[%c3] : memref<4xf32, #tpu.memory_space<smem>>
    %c0_0 = arith.constant 0 : index
    %c0_1 = arith.constant 0 : index
    %4 = vector.load %arg1[%c0_0, %c0_1] : memref<32x256xf32, #tpu.memory_space<vmem>>, vector<32x256xf32>
    %5 = vector.shape_cast %4 : vector<32x256xf32> to vector<2x16x256xf32>
    %c0_2 = arith.constant 0 : index
    %c0_3 = arith.constant 0 : index
    %6 = vector.load %arg2[%c0_2, %c0_3] : memref<256x256xf32, #tpu.memory_space<vmem>>, vector<256x256xf32>
    %cst = arith.constant dense<0.000000e+00> : vector<32x256xf32>
    %7 = tpu.matmul %4, %6, %cst {dimension_numbers = #tpu.dot_dimension_numbers<[1], [0], [0], [1], [0, 0, 1, 1], [], []>} : vector<32x256xf32>, vector<256x256xf32>, vector<32x256xf32> -> vector<32x256xf32>
    %8 = vector.shape_cast %7 : vector<32x256xf32> to vector<2x16x256xf32>
    %9 = vector.broadcast %0 : f32 to vector<2x16x256xf32>
    %10 = arith.mulf %9, %8 : vector<2x16x256xf32>
    %11 = arith.addf %5, %10 : vector<2x16x256xf32>
    %cst_4 = arith.constant dense<0.000000e+00> : vector<2x16xf32>
    %12 = vector.multi_reduction <add>, %5, %cst_4 [2] : vector<2x16x256xf32> to vector<2x16xf32>
    %cst_5 = arith.constant 2.560000e+02 : f32
    %13 = vector.broadcast %cst_5 : f32 to vector<2x16xf32>
    %14 = arith.divf %12, %13 : vector<2x16xf32>
    %c0_6 = arith.constant 0 : index
    %c0_7 = arith.constant 0 : index
    %15 = vector.load %arg3[%c0_6, %c0_7] : memref<16x2xf32, #tpu.memory_space<vmem>>, vector<16x2xf32>
    %cst_8 = arith.constant dense<0.000000e+00> : vector<2x2xf32>
    %16 = tpu.matmul %14, %15, %cst_8 {dimension_numbers = #tpu.dot_dimension_numbers<[1], [0], [0], [1], [0, 0, 1, 1], [], []>} : vector<2x16xf32>, vector<16x2xf32>, vector<2x2xf32> -> vector<2x2xf32>
    %c0_9 = arith.constant 0 : index
    %c0_10 = arith.constant 0 : index
    %17 = vector.load %arg4[%c0_9, %c0_10] : memref<1x2xf32, #tpu.memory_space<vmem>>, vector<1x2xf32>
    %18 = vector.broadcast %17 : vector<1x2xf32> to vector<2x2xf32>
    %19 = arith.addf %16, %18 : vector<2x2xf32>
    %cst_11 = arith.constant 0.000000e+00 : f32
    %20 = vector.broadcast %cst_11 : f32 to vector<2x2xf32>
    %21 = arith.maximumf %19, %20 : vector<2x2xf32>
    %c0_12 = arith.constant 0 : index
    %c0_13 = arith.constant 0 : index
    %22 = vector.load %arg5[%c0_12, %c0_13] : memref<2x16xf32, #tpu.memory_space<vmem>>, vector<2x16xf32>
    %cst_14 = arith.constant dense<0.000000e+00> : vector<2x16xf32>
    %23 = tpu.matmul %21, %22, %cst_14 {dimension_numbers = #tpu.dot_dimension_numbers<[1], [0], [0], [1], [0, 0, 1, 1], [], []>} : vector<2x2xf32>, vector<2x16xf32>, vector<2x16xf32> -> vector<2x16xf32>
    %c0_15 = arith.constant 0 : index
    %c0_16 = arith.constant 0 : index
    %24 = vector.load %arg6[%c0_15, %c0_16] : memref<1x16xf32, #tpu.memory_space<vmem>>, vector<1x16xf32>
    %25 = vector.broadcast %24 : vector<1x16xf32> to vector<2x16xf32>
    %26 = arith.addf %23, %25 : vector<2x16xf32>
    %cst_17 = arith.constant 0.000000e+00 : f32
    %27 = vector.broadcast %cst_17 : f32 to vector<2x16xf32>
    %28 = arith.subf %27, %26 : vector<2x16xf32>
    %29 = math.exp %28 : vector<2x16xf32>
    %cst_18 = arith.constant 1.000000e+00 : f32
    %30 = vector.broadcast %cst_18 : f32 to vector<2x16xf32>
    %31 = arith.addf %30, %29 : vector<2x16xf32>
    %cst_19 = arith.constant 1.000000e+00 : f32
    %32 = vector.broadcast %cst_19 : f32 to vector<2x16xf32>
    %33 = arith.divf %32, %31 : vector<2x16xf32>
    %34 = vector.shape_cast %33 : vector<2x16xf32> to vector<2x16x1xf32>
    %35 = vector.broadcast %34 : vector<2x16x1xf32> to vector<2x16x256xf32>
    %36 = arith.mulf %5, %35 : vector<2x16x256xf32>
    %cst_20 = arith.constant dense<0.000000e+00> : vector<2x256xf32>
    %37 = vector.multi_reduction <add>, %5, %cst_20 [1] : vector<2x16x256xf32> to vector<2x256xf32>
    %cst_21 = arith.constant 1.600000e+01 : f32
    %38 = vector.broadcast %cst_21 : f32 to vector<2x256xf32>
    %39 = arith.divf %37, %38 : vector<2x256xf32>
    %cst_22 = arith.constant dense<0xFF800000> : vector<2x256xf32>
    %40 = vector.multi_reduction <maximumf>, %5, %cst_22 [1] : vector<2x16x256xf32> to vector<2x256xf32>
    %c0_23 = arith.constant 0 : index
    %c0_24 = arith.constant 0 : index
    %41 = vector.load %arg7[%c0_23, %c0_24] : memref<256x256xf32, #tpu.memory_space<vmem>>, vector<256x256xf32>
    %cst_25 = arith.constant dense<0.000000e+00> : vector<2x256xf32>
    %42 = tpu.matmul %39, %41, %cst_25 {dimension_numbers = #tpu.dot_dimension_numbers<[1], [0], [0], [1], [0, 0, 1, 1], [], []>} : vector<2x256xf32>, vector<256x256xf32>, vector<2x256xf32> -> vector<2x256xf32>
    %c0_26 = arith.constant 0 : index
    %c0_27 = arith.constant 0 : index
    %43 = vector.load %arg8[%c0_26, %c0_27] : memref<256x256xf32, #tpu.memory_space<vmem>>, vector<256x256xf32>
    %cst_28 = arith.constant dense<0.000000e+00> : vector<2x256xf32>
    %44 = tpu.matmul %40, %43, %cst_28 {dimension_numbers = #tpu.dot_dimension_numbers<[1], [0], [0], [1], [0, 0, 1, 1], [], []>} : vector<2x256xf32>, vector<256x256xf32>, vector<2x256xf32> -> vector<2x256xf32>
    %45 = arith.addf %42, %44 : vector<2x256xf32>
    %46 = vector.broadcast %3 : f32 to vector<2x256xf32>
    %47 = arith.addf %45, %46 : vector<2x256xf32>
    %cst_29 = arith.constant 0.000000e+00 : f32
    %48 = vector.broadcast %cst_29 : f32 to vector<2x256xf32>
    %49 = arith.subf %48, %47 : vector<2x256xf32>
    %50 = math.exp %49 : vector<2x256xf32>
    %cst_30 = arith.constant 1.000000e+00 : f32
    %51 = vector.broadcast %cst_30 : f32 to vector<2x256xf32>
    %52 = arith.addf %51, %50 : vector<2x256xf32>
    %cst_31 = arith.constant 1.000000e+00 : f32
    %53 = vector.broadcast %cst_31 : f32 to vector<2x256xf32>
    %54 = arith.divf %53, %52 : vector<2x256xf32>
    %55 = vector.shape_cast %54 : vector<2x256xf32> to vector<2x1x256xf32>
    %56 = vector.broadcast %55 : vector<2x1x256xf32> to vector<2x16x256xf32>
    %57 = arith.mulf %36, %56 : vector<2x16x256xf32>
    %58 = vector.broadcast %1 : f32 to vector<2x16x256xf32>
    %59 = arith.mulf %58, %57 : vector<2x16x256xf32>
    %60 = arith.addf %5, %59 : vector<2x16x256xf32>
    %cst_32 = arith.constant 0.000000e+00 : f32
    %61 = arith.subf %cst_32, %2 : f32
    %62 = math.exp %61 : f32
    %cst_33 = arith.constant 1.000000e+00 : f32
    %63 = arith.addf %cst_33, %62 : f32
    %cst_34 = arith.constant 1.000000e+00 : f32
    %64 = arith.divf %cst_34, %63 : f32
    %65 = vector.broadcast %64 : f32 to vector<2x16x256xf32>
    %66 = arith.mulf %65, %60 : vector<2x16x256xf32>
    %cst_35 = arith.constant 1.000000e+00 : f32
    %67 = arith.subf %cst_35, %64 : f32
    %68 = vector.broadcast %67 : f32 to vector<2x16x256xf32>
    %69 = arith.mulf %68, %11 : vector<2x16x256xf32>
    %70 = arith.addf %66, %69 : vector<2x16x256xf32>
    %cst_36 = arith.constant dense<0.000000e+00> : vector<2x16xf32>
    %71 = vector.multi_reduction <add>, %70, %cst_36 [2] : vector<2x16x256xf32> to vector<2x16xf32>
    %cst_37 = arith.constant 2.560000e+02 : f32
    %72 = vector.broadcast %cst_37 : f32 to vector<2x16xf32>
    %73 = arith.divf %71, %72 : vector<2x16xf32>
    %c0_38 = arith.constant 0 : index
    %c0_39 = arith.constant 0 : index
    %74 = vector.load %arg9[%c0_38, %c0_39] : memref<16x32xf32, #tpu.memory_space<vmem>>, vector<16x32xf32>
    %cst_40 = arith.constant dense<0.000000e+00> : vector<2x32xf32>
    %75 = tpu.matmul %73, %74, %cst_40 {dimension_numbers = #tpu.dot_dimension_numbers<[1], [0], [0], [1], [0, 0, 1, 1], [], []>} : vector<2x16xf32>, vector<16x32xf32>, vector<2x32xf32> -> vector<2x32xf32>
    %c0_41 = arith.constant 0 : index
    %c0_42 = arith.constant 0 : index
    %76 = vector.load %arg10[%c0_41, %c0_42] : memref<1x32xf32, #tpu.memory_space<vmem>>, vector<1x32xf32>
    %77 = vector.broadcast %76 : vector<1x32xf32> to vector<2x32xf32>
    %78 = arith.addf %75, %77 : vector<2x32xf32>
    %cst_43 = arith.constant 3.000000e+00 : f32
    %79 = vector.broadcast %cst_43 : f32 to vector<2x32xf32>
    %80 = arith.addf %78, %79 : vector<2x32xf32>
    %cst_44 = arith.constant 0.000000e+00 : f32
    %cst_45 = arith.constant 6.000000e+00 : f32
    %81 = vector.broadcast %cst_44 : f32 to vector<2x32xf32>
    %82 = arith.maximumf %81, %80 : vector<2x32xf32>
    %83 = vector.broadcast %cst_45 : f32 to vector<2x32xf32>
    %84 = arith.minimumf %83, %82 : vector<2x32xf32>
    %85 = arith.mulf %78, %84 : vector<2x32xf32>
    %cst_46 = arith.constant 0.166666672 : f32
    %86 = vector.broadcast %cst_46 : f32 to vector<2x32xf32>
    %87 = arith.mulf %85, %86 : vector<2x32xf32>
    %c0_47 = arith.constant 0 : index
    %c0_48 = arith.constant 0 : index
    %88 = vector.load %arg11[%c0_47, %c0_48] : memref<32x10xf32, #tpu.memory_space<vmem>>, vector<32x10xf32>
    %cst_49 = arith.constant dense<0.000000e+00> : vector<2x10xf32>
    %89 = tpu.matmul %87, %88, %cst_49 {dimension_numbers = #tpu.dot_dimension_numbers<[1], [0], [0], [1], [0, 0, 1, 1], [], []>} : vector<2x32xf32>, vector<32x10xf32>, vector<2x10xf32> -> vector<2x10xf32>
    %c0_50 = arith.constant 0 : index
    %c0_51 = arith.constant 0 : index
    %90 = vector.load %arg12[%c0_50, %c0_51] : memref<1x10xf32, #tpu.memory_space<vmem>>, vector<1x10xf32>
    %91 = vector.broadcast %90 : vector<1x10xf32> to vector<2x10xf32>
    %92 = arith.addf %89, %91 : vector<2x10xf32>
    %c0_52 = arith.constant 0 : index
    %c0_53 = arith.constant 0 : index
    %93 = vector.load %arg13[%c0_52, %c0_53] : memref<2x10xf32, #tpu.memory_space<vmem>>, vector<2x10xf32>
    tpu.vector_store %arg13[%c0_52, %c0_53], %92 {strides = array<i32>} : memref<2x10xf32, #tpu.memory_space<vmem>>, vector<2x10xf32>,
    return
  }
}

</mosaic_0001>

<llo_original>
// kernel: bio_inspired_cnn_forward.1
$region0: #{bio_inspired_cnn_forward.1}
  #allocation0 [shape = 'u32[]', space=smem, size = 0x4, offset = 0x4, fixed_abs, tag = 'smem constant byte address 0x4 - core index']
  #allocation1 [shape = 'u32[144,128]{1,0:T(1,128)}', space=vmem, size = 0x12000, scoped, tag = 'internal scratch']
  %s0 = inlined_call_operand.vmem [shape: f32[4], index: 0, kind: input, shape index: {}]
  %s1 = inlined_call_operand.vmem [shape: f32[32,256], index: 1, kind: input, shape index: {}]
  %s2 = inlined_call_operand.vmem [shape: f32[256,256], index: 2, kind: input, shape index: {}]
  %s3 = inlined_call_operand.vmem [shape: f32[16,2], index: 3, kind: input, shape index: {}]
  %s4 = inlined_call_operand.vmem [shape: f32[1,2], index: 4, kind: input, shape index: {}]
  %s5 = inlined_call_operand.vmem [shape: f32[2,16], index: 5, kind: input, shape index: {}]
  %s6 = inlined_call_operand.vmem [shape: f32[1,16], index: 6, kind: input, shape index: {}]
  %s7 = inlined_call_operand.hbm [shape: f32[256,256], index: 7, kind: input, shape index: {}]
  %s8 = inlined_call_operand.hbm [shape: f32[256,256], index: 8, kind: input, shape index: {}]
  %s9 = inlined_call_operand.vmem [shape: f32[16,32], index: 9, kind: input, shape index: {}]
  %s10 = inlined_call_operand.vmem [shape: f32[1,32], index: 10, kind: input, shape index: {}]
  %s11 = inlined_call_operand.vmem [shape: f32[32,10], index: 11, kind: input, shape index: {}]
  %s12 = inlined_call_operand.vmem [shape: f32[1,10], index: 12, kind: input, shape index: {}]
  %s13 = inlined_call_operand.hbm [shape: f32[2,10], index: 13, kind: output, shape index: {}]
  %s14 = sld [smem:[#allocation0]]
  $region74: #{bio_inspired_cnn_forward.1} parent=0
    _
  %s16 = ssub.s32 1, %s14
  %s17 = scalar_select 0, %s16, %s14
  $region1: #{bio_inspired_cnn_forward.1} parent=0
    #allocation2 [shape = 'u8[512]{0}', space=smem, size = 0x200, scoped, tag = 'input window, operand 0, single buffered']
    #allocation3 [shape = 's32[1]{0}', space=sflag, size = 0x4, scoped, tag = 'scoped memory for bio_inspired_cnn_forward.1']
    #allocation4 [shape = 's32[1]{0}', space=sflag, size = 0x4, scoped, tag = 'scoped memory for bio_inspired_cnn_forward.1']
    #allocation5 [shape = 's32[1]{0}', space=sflag, size = 0x4, scoped, tag = 'scoped memory for bio_inspired_cnn_forward.1']
    #allocation6 [shape = 'u8[262144]{0}', space=vmem, size = 0x40000, scoped, tag = 'input window, operand 7, single buffered']
    #allocation7 [shape = 'u8[262144]{0}', space=vmem, size = 0x40000, scoped, tag = 'input window, operand 8, single buffered']
    #allocation8 [shape = 's32[1]{0}', space=sflag, size = 0x4, scoped, tag = 'scoped memory for bio_inspired_cnn_forward.1']
    #allocation9 [shape = 'u8[1024]{0}', space=vmem, size = 0x400, scoped, tag = 'output window, operand 0, single buffered']
    %18 = vsyncpa [#allocation5], 0
    %19 = vsyncpa [#allocation3], 0
    %20 = vsyncpa [#allocation8], 0
    %21 = vsyncpa [#allocation4], 0
    // Predicated region
    $region2: #{bio_inspired_cnn_forward.1} parent=1 // pred_check
      _
    $region3: #{bio_inspired_cnn_forward.1} parent=1 // pred_check_branch
      %23 = sbr.rel (0) target = $region5
    $region4: #{bio_inspired_cnn_forward.1} parent=1 // pred_region
      %s25 = ssub.s32 16, 16
      %26 = vsyncadd [#allocation5], %s25
      %s28 = sshll.u32 %s0, 4
      %s29 = int_to_ptr.vmem [resolvable:$true] %s28
      %31 = dma.vmem_to_smem %s29, 16, [#allocation2], [#allocation5]
    $region5: #{bio_inspired_cnn_forward.1} parent=1 // pred_fallthru
      _
    // Predicated region
    $region6: #{bio_inspired_cnn_forward.1} parent=1 // pred_check
      _
    $region7: #{bio_inspired_cnn_forward.1} parent=1 // pred_check_branch
      %33 = sbr.rel (0) target = $region9
    $region8: #{bio_inspired_cnn_forward.1} parent=1 // pred_region
      _
    $region9: #{bio_inspired_cnn_forward.1} parent=1 // pred_fallthru
      _
    // Predicated region
    $region10: #{bio_inspired_cnn_forward.1} parent=1 // pred_check
      _
    $region11: #{bio_inspired_cnn_forward.1} parent=1 // pred_check_branch
      %35 = sbr.rel (0) target = $region13
    $region12: #{bio_inspired_cnn_forward.1} parent=1 // pred_region
      _
    $region13: #{bio_inspired_cnn_forward.1} parent=1 // pred_fallthru
      _
    // Predicated region
    $region14: #{bio_inspired_cnn_forward.1} parent=1 // pred_check
      _
    $region15: #{bio_inspired_cnn_forward.1} parent=1 // pred_check_branch
      %37 = sbr.rel (0) target = $region17
    $region16: #{bio_inspired_cnn_forward.1} parent=1 // pred_region
      _
    $region17: #{bio_inspired_cnn_forward.1} parent=1 // pred_fallthru
      _
    // Predicated region
    $region18: #{bio_inspired_cnn_forward.1} parent=1 // pred_check
      _
    $region19: #{bio_inspired_cnn_forward.1} parent=1 // pred_check_branch
      %39 = sbr.rel (0) target = $region21
    $region20: #{bio_inspired_cnn_forward.1} parent=1 // pred_region
      _
    $region21: #{bio_inspired_cnn_forward.1} parent=1 // pred_fallthru
      _
    // Predicated region
    $region22: #{bio_inspired_cnn_forward.1} parent=1 // pred_check
      _
    $region23: #{bio_inspired_cnn_forward.1} parent=1 // pred_check_branch
      %41 = sbr.rel (0) target = $region25
    $region24: #{bio_inspired_cnn_forward.1} parent=1 // pred_region
      _
    $region25: #{bio_inspired_cnn_forward.1} parent=1 // pred_fallthru
      _
    // Predicated region
    $region26: #{bio_inspired_cnn_forward.1} parent=1 // pred_check
      _
    $region27: #{bio_inspired_cnn_forward.1} parent=1 // pred_check_branch
      %43 = sbr.rel (0) target = $region29
    $region28: #{bio_inspired_cnn_forward.1} parent=1 // pred_region
      _
    $region29: #{bio_inspired_cnn_forward.1} parent=1 // pred_fallthru
      _
    // Predicated region
    $region30: #{bio_inspired_cnn_forward.1} parent=1 // pred_check
      _
    $region31: #{bio_inspired_cnn_forward.1} parent=1 // pred_check_branch
      %45 = sbr.rel (0) target = $region33
    $region32: #{bio_inspired_cnn_forward.1} parent=1 // pred_region
      %s47 = ssub.s32 8192, 8192
      %48 = vsyncadd [#allocation3], %s47
      %s49 = sshll.u32 [#allocation6], 4
      %s50 = int_to_ptr.vmem [resolvable:$true] %s49
      %55 = dma.hbm_to_vmem [thread:$0]  %s7, 8192, %s50, [#allocation3], 256, 256, 16
    $region33: #{bio_inspired_cnn_forward.1} parent=1 // pred_fallthru
      _
    // Predicated region
    $region34: #{bio_inspired_cnn_forward.1} parent=1 // pred_check
      _
    $region35: #{bio_inspired_cnn_forward.1} parent=1 // pred_check_branch
      %57 = sbr.rel (0) target = $region37
    $region36: #{bio_inspired_cnn_forward.1} parent=1 // pred_region
      %s59 = ssub.s32 8192, 8192
      %60 = vsyncadd [#allocation8], %s59
      %s61 = sshll.u32 [#allocation7], 4
      %s62 = int_to_ptr.vmem [resolvable:$true] %s61
      %67 = dma.hbm_to_vmem [thread:$0]  %s8, 8192, %s62, [#allocation8], 256, 256, 16
    $region37: #{bio_inspired_cnn_forward.1} parent=1 // pred_fallthru
      _
    // Predicated region
    $region38: #{bio_inspired_cnn_forward.1} parent=1 // pred_check
      _
    $region39: #{bio_inspired_cnn_forward.1} parent=1 // pred_check_branch
      %69 = sbr.rel (0) target = $region41
    $region40: #{bio_inspired_cnn_forward.1} parent=1 // pred_region
      _
    $region41: #{bio_inspired_cnn_forward.1} parent=1 // pred_fallthru
      _
    // Predicated region
    $region42: #{bio_inspired_cnn_forward.1} parent=1 // pred_check
      _
    $region43: #{bio_inspired_cnn_forward.1} parent=1 // pred_check_branch
      %71 = sbr.rel (0) target = $region45
    $region44: #{bio_inspired_cnn_forward.1} parent=1 // pred_region
      _
    $region45: #{bio_inspired_cnn_forward.1} parent=1 // pred_fallthru
      _
    // Predicated region
    $region46: #{bio_inspired_cnn_forward.1} parent=1 // pred_check
      _
    $region47: #{bio_inspired_cnn_forward.1} parent=1 // pred_check_branch
      %73 = sbr.rel (0) target = $region49
    $region48: #{bio_inspired_cnn_forward.1} parent=1 // pred_region
      _
    $region49: #{bio_inspired_cnn_forward.1} parent=1 // pred_fallthru
      _
    // Predicated region
    $region50: #{bio_inspired_cnn_forward.1} parent=1 // pred_check
      _
    $region51: #{bio_inspired_cnn_forward.1} parent=1 // pred_check_branch
      %75 = sbr.rel (0) target = $region53
    $region52: #{bio_inspired_cnn_forward.1} parent=1 // pred_region
      _
    $region53: #{bio_inspired_cnn_forward.1} parent=1 // pred_fallthru
      _
    // Predicated region
    $region54: #{bio_inspired_cnn_forward.1} parent=1 // pred_check
      _
    $region55: #{bio_inspired_cnn_forward.1} parent=1 // pred_check_branch
      %77 = sbr.rel (0) target = $region57
    $region56: #{bio_inspired_cnn_forward.1} parent=1 // pred_region
      %78 = dma.done [#allocation5], 16
    $region57: #{bio_inspired_cnn_forward.1} parent=1 // pred_fallthru
      _
    // Predicated region
    $region58: #{bio_inspired_cnn_forward.1} parent=1 // pred_check
      _
    $region59: #{bio_inspired_cnn_forward.1} parent=1 // pred_check_branch
      %80 = sbr.rel (0) target = $region61
    $region60: #{bio_inspired_cnn_forward.1} parent=1 // pred_region
      %81 = dma.done [#allocation3], 8192
    $region61: #{bio_inspired_cnn_forward.1} parent=1 // pred_fallthru
      _
    // Predicated region
    $region62: #{bio_inspired_cnn_forward.1} parent=1 // pred_check
      _
    $region63: #{bio_inspired_cnn_forward.1} parent=1 // pred_check_branch
      %83 = sbr.rel (0) target = $region65
    $region64: #{bio_inspired_cnn_forward.1} parent=1 // pred_region
      %84 = dma.done [#allocation8], 8192
    $region65: #{bio_inspired_cnn_forward.1} parent=1 // pred_fallthru
      _
    %85 = sfence
    %s86 = sld [smem:[#allocation2]]
    %s87 = sld [smem:[#allocation2 + $0x1]]
    %s88 = sld [smem:[#allocation2 + $0x2]]
    %s89 = sld [smem:[#allocation2 + $0x3]]
    %v90 = vld [vmem:[%s1] sm:$0xff]
    %v91 = vld [vmem:[%s1 + $0x8] sm:$0xff]
    %v92 = vld [vmem:[%s1 + $0x10] sm:$0xff]
    %v93 = vld [vmem:[%s1 + $0x18] sm:$0xff]
    %v94 = vld [vmem:[%s1 + $0x20] sm:$0xff]
    %v95 = vld [vmem:[%s1 + $0x28] sm:$0xff]
    %v96 = vld [vmem:[%s1 + $0x30] sm:$0xff]
    %v97 = vld [vmem:[%s1 + $0x38] sm:$0xff]
    %v98 = vld [vmem:[%s2] sm:$0xff]
    %v99 = vld [vmem:[%s2 + $0x8] sm:$0xff]
    %v100 = vld [vmem:[%s2 + $0x10] sm:$0xff]
    %v101 = vld [vmem:[%s2 + $0x18] sm:$0xff]
    %v102 = vld [vmem:[%s2 + $0x20] sm:$0xff]
    %v103 = vld [vmem:[%s2 + $0x28] sm:$0xff]
    %v104 = vld [vmem:[%s2 + $0x30] sm:$0xff]
    %v105 = vld [vmem:[%s2 + $0x38] sm:$0xff]
    %v106 = vld [vmem:[%s2 + $0x40] sm:$0xff]
    %v107 = vld [vmem:[%s2 + $0x48] sm:$0xff]
    %v108 = vld [vmem:[%s2 + $0x50] sm:$0xff]
    %v109 = vld [vmem:[%s2 + $0x58] sm:$0xff]
    %v110 = vld [vmem:[%s2 + $0x60] sm:$0xff]
    %v111 = vld [vmem:[%s2 + $0x68] sm:$0xff]
    %v112 = vld [vmem:[%s2 + $0x70] sm:$0xff]
    %v113 = vld [vmem:[%s2 + $0x78] sm:$0xff]
    %v114 = vld [vmem:[%s2 + $0x80] sm:$0xff]
    %v115 = vld [vmem:[%s2 + $0x88] sm:$0xff]
    %v116 = vld [vmem:[%s2 + $0x90] sm:$0xff]
    %v117 = vld [vmem:[%s2 + $0x98] sm:$0xff]
    %v118 = vld [vmem:[%s2 + $0xa0] sm:$0xff]
    %v119 = vld [vmem:[%s2 + $0xa8] sm:$0xff]
    %v120 = vld [vmem:[%s2 + $0xb0] sm:$0xff]
    %v121 = vld [vmem:[%s2 + $0xb8] sm:$0xff]
    %v122 = vld [vmem:[%s2 + $0xc0] sm:$0xff]
    %v123 = vld [vmem:[%s2 + $0xc8] sm:$0xff]
    %v124 = vld [vmem:[%s2 + $0xd0] sm:$0xff]
    %v125 = vld [vmem:[%s2 + $0xd8] sm:$0xff]
    %v126 = vld [vmem:[%s2 + $0xe0] sm:$0xff]
    %v127 = vld [vmem:[%s2 + $0xe8] sm:$0xff]
    %v128 = vld [vmem:[%s2 + $0xf0] sm:$0xff]
    %v129 = vld [vmem:[%s2 + $0xf8] sm:$0xff]
    %v130 = vld [vmem:[%s2 + $0x100] sm:$0xff]
    %v131 = vld [vmem:[%s2 + $0x108] sm:$0xff]
    %v132 = vld [vmem:[%s2 + $0x110] sm:$0xff]
    %v133 = vld [vmem:[%s2 + $0x118] sm:$0xff]
    %v134 = vld [vmem:[%s2 + $0x120] sm:$0xff]
    %v135 = vld [vmem:[%s2 + $0x128] sm:$0xff]
    %v136 = vld [vmem:[%s2 + $0x130] sm:$0xff]
    %v137 = vld [vmem:[%s2 + $0x138] sm:$0xff]
    %v138 = vld [vmem:[%s2 + $0x140] sm:$0xff]
    %v139 = vld [vmem:[%s2 + $0x148] sm:$0xff]
    %v140 = vld [vmem:[%s2 + $0x150] sm:$0xff]
    %v141 = vld [vmem:[%s2 + $0x158] sm:$0xff]
    %v142 = vld [vmem:[%s2 + $0x160] sm:$0xff]
    %v143 = vld [vmem:[%s2 + $0x168] sm:$0xff]
    %v144 = vld [vmem:[%s2 + $0x170] sm:$0xff]
    %v145 = vld [vmem:[%s2 + $0x178] sm:$0xff]
    %v146 = vld [vmem:[%s2 + $0x180] sm:$0xff]
    %v147 = vld [vmem:[%s2 + $0x188] sm:$0xff]
    %v148 = vld [vmem:[%s2 + $0x190] sm:$0xff]
    %v149 = vld [vmem:[%s2 + $0x198] sm:$0xff]
    %v150 = vld [vmem:[%s2 + $0x1a0] sm:$0xff]
    %v151 = vld [vmem:[%s2 + $0x1a8] sm:$0xff]
    %v152 = vld [vmem:[%s2 + $0x1b0] sm:$0xff]
    %v153 = vld [vmem:[%s2 + $0x1b8] sm:$0xff]
    %v154 = vld [vmem:[%s2 + $0x1c0] sm:$0xff]
    %v155 = vld [vmem:[%s2 + $0x1c8] sm:$0xff]
    %v156 = vld [vmem:[%s2 + $0x1d0] sm:$0xff]
    %v157 = vld [vmem:[%s2 + $0x1d8] sm:$0xff]
    %v158 = vld [vmem:[%s2 + $0x1e0] sm:$0xff]
    %v159 = vld [vmem:[%s2 + $0x1e8] sm:$0xff]
    %v160 = vld [vmem:[%s2 + $0x1f0] sm:$0xff]
    %v161 = vld [vmem:[%s2 + $0x1f8] sm:$0xff]
    %162 = vmatprep.subr.mxu0 %v99
    %163 = vmatpush1.msra.mxu0 %v98
    %164 = vmatprep.subr.mxu0 %v101
    %165 = vmatpush1.msra.mxu0 %v100
    %166 = vmatprep.subr.mxu0 %v103
    %167 = vmatpush1.msra.mxu0 %v102
    %168 = vmatprep.subr.mxu0 %v105
    %169 = vmatpush1.msra.mxu0 %v104
    %170 = vmatprep.subr.mxu0 %v107
    %171 = vmatpush1.msra.mxu0 %v106
    %172 = vmatprep.subr.mxu0 %v109
    %173 = vmatpush1.msra.mxu0 %v108
    %174 = vmatprep.subr.mxu0 %v111
    %175 = vmatpush1.msra.mxu0 %v110
    %176 = vmatprep.subr.mxu0 %v113
    %177 = vmatpush1.msra.mxu0 %v112
    %178 = vmatprep.subr.mxu0 %v115
    %179 = vmatpush1.msra.mxu0 %v114
    %180 = vmatprep.subr.mxu0 %v117
    %181 = vmatpush1.msra.mxu0 %v116
    %182 = vmatprep.subr.mxu0 %v119
    %183 = vmatpush1.msra.mxu0 %v118
    %184 = vmatprep.subr.mxu0 %v121
    %185 = vmatpush1.msra.mxu0 %v120
    %186 = vmatprep.subr.mxu0 %v123
    %187 = vmatpush1.msra.mxu0 %v122
    %188 = vmatprep.subr.mxu0 %v125
    %189 = vmatpush1.msra.mxu0 %v124
    %190 = vmatprep.subr.mxu0 %v127
    %191 = vmatpush1.msra.mxu0 %v126
    %192 = vmatprep.subr.mxu0 %v129
    %193 = vmatpush1.msra.mxu0 %v128
    %194 = vmatprep.subr.mxu0 %v131
    %195 = vmatpush1.msra.mxu0 %v130
    %196 = vmatprep.subr.mxu0 %v133
    %197 = vmatpush1.msra.mxu0 %v132
    %198 = vmatprep.subr.mxu0 %v135
    %199 = vmatpush1.msra.mxu0 %v134
    %200 = vmatprep.subr.mxu0 %v137
    %201 = vmatpush1.msra.mxu0 %v136
    %202 = vmatprep.subr.mxu0 %v139
    %203 = vmatpush1.msra.mxu0 %v138
    %204 = vmatprep.subr.mxu0 %v141
    %205 = vmatpush1.msra.mxu0 %v140
    %206 = vmatprep.subr.mxu0 %v143
    %207 = vmatpush1.msra.mxu0 %v142
    %208 = vmatprep.subr.mxu0 %v145
    %209 = vmatpush1.msra.mxu0 %v144
    %210 = vmatprep.subr.mxu0 %v147
    %211 = vmatpush1.msra.mxu0 %v146
    %212 = vmatprep.subr.mxu0 %v149
    %213 = vmatpush1.msra.mxu0 %v148
    %214 = vmatprep.subr.mxu0 %v151
    %215 = vmatpush1.msra.mxu0 %v150
    %216 = vmatprep.subr.mxu0 %v153
    %217 = vmatpush1.msra.mxu0 %v152
    %218 = vmatprep.subr.mxu0 %v155
    %219 = vmatpush1.msra.mxu0 %v154
    %220 = vmatprep.subr.mxu0 %v157
    %221 = vmatpush1.msra.mxu0 %v156
    %222 = vmatprep.subr.mxu0 %v159
    %223 = vmatpush1.msra.mxu0 %v158
    %224 = vmatprep.subr.mxu0 %v161
    %225 = vmatpush1.msra.mxu0 %v160
    %226 = vmatprep.mubr.f32.mxu0 %v91
    %227 = vmatmul.mubr.f32.gmra.mrb[0].mxu0 %v90
    %v228 = vpop.f32.mrb[0].mxu0
    %v229 = vadd.f32 0.0, %v228
    %v230 = vpop.f32.mrb[0].mxu0
    %v231 = vadd.f32 0.0, %v230
    %232 = vmatprep.mubr.f32.mxu0 %v93
    %233 = vmatmul.mubr.f32.gmra.mrb[0].mxu0 %v92
    %v234 = vpop.f32.mrb[0].mxu0
    %v235 = vadd.f32 0.0, %v234
    %v236 = vpop.f32.mrb[0].mxu0
    %v237 = vadd.f32 0.0, %v236
    %238 = vmatprep.mubr.f32.mxu0 %v95
    %239 = vmatmul.mubr.f32.gmra.mrb[0].mxu0 %v94
    %v240 = vpop.f32.mrb[0].mxu0
    %v241 = vadd.f32 0.0, %v240
    %v242 = vpop.f32.mrb[0].mxu0
    %v243 = vadd.f32 0.0, %v242
    %244 = vmatprep.mubr.f32.mxu0 %v97
    %245 = vmatmul.mubr.f32.gmra.mrb[0].mxu0 %v96
    %v246 = vpop.f32.mrb[0].mxu0
    %v247 = vadd.f32 0.0, %v246
    %v248 = vpop.f32.mrb[0].mxu0
    %v249 = vadd.f32 0.0, %v248
    %250 = vdwg.mxu0
    %v251 = vstv %s86
    %v252 = vmul.f32 %v251, %v229
    %v253 = vmul.f32 %v251, %v231
    %v254 = vmul.f32 %v251, %v235
    %v255 = vmul.f32 %v251, %v237
    %v256 = vmul.f32 %v251, %v241
    %v257 = vmul.f32 %v251, %v243
    %v258 = vmul.f32 %v251, %v247
    %v259 = vmul.f32 %v251, %v249
    %v260 = vadd.f32 %v90, %v252
    %v261 = vadd.f32 %v91, %v253
    %v262 = vadd.f32 %v92, %v254
    %v263 = vadd.f32 %v93, %v255
    %v264 = vadd.f32 %v94, %v256
    %v265 = vadd.f32 %v95, %v257
    %v266 = vadd.f32 %v96, %v258
    %v267 = vadd.f32 %v97, %v259
    %v268 = vadd.f32 %v90, %v91
    %269 = vadd.xlane.f32.xlu0 %v268
    %v270 = vpop.xlane.xlu0 %269
    %v271 = vadd.f32 %v92, %v93
    %272 = vadd.xlane.f32.xlu0 %v271
    %v273 = vpop.xlane.xlu0 %272
    %v274 = vadd.f32 %v94, %v95
    %275 = vadd.xlane.f32.xlu0 %v274
    %v276 = vpop.xlane.xlu0 %275
    %v277 = vadd.f32 %v96, %v97
    %278 = vadd.xlane.f32.xlu0 %v277
    %v279 = vpop.xlane.xlu0 %278
    %v280 = vrcp.pop 256.0
    %v281 = vmul.f32 %v270, %v280
    %v282 = vmul.f32 %v273, %v280
    %v283 = vmul.f32 %v276, %v280
    %v284 = vmul.f32 %v279, %v280
    %v285 = vld [vmem:[%s3] sm:$0xff]
    %v286 = vld [vmem:[%s3 + $0x8] sm:$0xff]
    %v287 = vld [vmem:[%s4] sm:$0x1]
    %v289 = vlaneseq
    %v290 = vshrl.u32 %v289, 7
    %v291 = vsub.s32 0, %v290
    %v292 = vrot.slane %v287, %v291
    %v298 = vlaneseq
    %v299 = vand.u32 %v298, 127
    %v300 = vlaneseq
    %v301 = vshrl.u32 %v300, 7
    %v302 = vsub.s32 %v299, %v301
    %v303 = vrot.slane %v281, %v302
    %v304 = vadd.s32 %v299, 4294967288
    %v305 = vlaneseq
    %v306 = vshrl.u32 %v305, 7
    %v307 = vsub.s32 %v304, %v306
    %v308 = vrot.slane %v282, %v307
    %vm309 = vcmask 130112
    %v310 = vsel %vm309, %v308, %v303
    %v311 = vlaneseq
    %v312 = vshrl.u32 %v311, 7
    %v313 = vsub.s32 %v299, %v312
    %v314 = vrot.slane %v283, %v313
    %v315 = vlaneseq
    %v316 = vshrl.u32 %v315, 7
    %v317 = vsub.s32 %v304, %v316
    %v318 = vrot.slane %v284, %v317
    %v319 = vsel %vm309, %v318, %v314
    %vm320 = vcmask 1041409
    %v321 = vsel %vm320, %v319, %v310
    %vm322 = vcmask 130048
    %v323 = vsel %vm322, %v321, 0
    %325 = vmatprep.subr.mxu0 0.0
    %326 = vmatpush1.msra.mxu0 %v285
    %327 = vmatprep.subr.mxu0 0.0
    %328 = vmatpush1.msra.mxu0 %v286
    %329 = vmatprep.subr.mxu0 0.0
    %330 = vmatpush1.msra.mxu0 0.0
    %331 = vmatprep.subr.mxu0 0.0
    %332 = vmatpush1.msra.mxu0 0.0
    %333 = vmatprep.subr.mxu0 0.0
    %334 = vmatpush1.msra.mxu0 0.0
    %335 = vmatprep.subr.mxu0 0.0
    %336 = vmatpush1.msra.mxu0 0.0
    %337 = vmatprep.subr.mxu0 0.0
    %338 = vmatpush1.msra.mxu0 0.0
    %339 = vmatprep.subr.mxu0 0.0
    %340 = vmatpush1.msra.mxu0 0.0
    %341 = vmatprep.subr.mxu0 0.0
    %342 = vmatpush1.msra.mxu0 0.0
    %343 = vmatprep.subr.mxu0 0.0
    %344 = vmatpush1.msra.mxu0 0.0
    %345 = vmatprep.subr.mxu0 0.0
    %346 = vmatpush1.msra.mxu0 0.0
    %347 = vmatprep.subr.mxu0 0.0
    %348 = vmatpush1.msra.mxu0 0.0
    %349 = vmatprep.subr.mxu0 0.0
    %350 = vmatpush1.msra.mxu0 0.0
    %351 = vmatprep.subr.mxu0 0.0
    %352 = vmatpush1.msra.mxu0 0.0
    %353 = vmatprep.subr.mxu0 0.0
    %354 = vmatpush1.msra.mxu0 0.0
    %355 = vmatprep.subr.mxu0 0.0
    %356 = vmatpush1.msra.mxu0 0.0
    %357 = vmatprep.subr.mxu0 0.0
    %358 = vmatpush1.msra.mxu0 0.0
    %359 = vmatprep.subr.mxu0 0.0
    %360 = vmatpush1.msra.mxu0 0.0
    %361 = vmatprep.subr.mxu0 0.0
    %362 = vmatpush1.msra.mxu0 0.0
    %363 = vmatprep.subr.mxu0 0.0
    %364 = vmatpush1.msra.mxu0 0.0
    %365 = vmatprep.subr.mxu0 0.0
    %366 = vmatpush1.msra.mxu0 0.0
    %367 = vmatprep.subr.mxu0 0.0
    %368 = vmatpush1.msra.mxu0 0.0
    %369 = vmatprep.subr.mxu0 0.0
    %370 = vmatpush1.msra.mxu0 0.0
    %371 = vmatprep.subr.mxu0 0.0
    %372 = vmatpush1.msra.mxu0 0.0
    %373 = vmatprep.subr.mxu0 0.0
    %374 = vmatpush1.msra.mxu0 0.0
    %375 = vmatprep.subr.mxu0 0.0
    %376 = vmatpush1.msra.mxu0 0.0
    %377 = vmatprep.subr.mxu0 0.0
    %378 = vmatpush1.msra.mxu0 0.0
    %379 = vmatprep.subr.mxu0 0.0
    %380 = vmatpush1.msra.mxu0 0.0
    %381 = vmatprep.subr.mxu0 0.0
    %382 = vmatpush1.msra.mxu0 0.0
    %383 = vmatprep.subr.mxu0 0.0
    %384 = vmatpush1.msra.mxu0 0.0
    %385 = vmatprep.subr.mxu0 0.0
    %386 = vmatpush1.msra.mxu0 0.0
    %387 = vmatprep.subr.mxu0 0.0
    %388 = vmatpush1.msra.mxu0 0.0
    %389 = vmatprep.mubr.f32.mxu0 0.0
    %390 = vmatmul.mubr.f32.gmra.mrb[0].mxu0 %v323
    %v391 = vpop.f32.mrb[0].mxu0
    %v392 = vadd.f32 %v292, %v391
    %v393 = vpop.f32.mrb[0].mxu0
    %394 = vdwg.mxu0
    %v395 = vmax.f32 %v392, 0.0
    %v396 = vld [vmem:[%s5] sm:$0x3]
    %v397 = vld [vmem:[%s6] sm:$0x1]
    %v399 = vlaneseq
    %v400 = vshrl.u32 %v399, 7
    %v401 = vsub.s32 0, %v400
    %v402 = vrot.slane %v397, %v401
    %vm404 = vcmask 15360
    %v406 = vsel %vm404, %v395, 0
    %vm408 = vcmask 1041408
    %v410 = vsel %vm408, %v396, 0
    %412 = vmatprep.subr.mxu0 0.0
    %413 = vmatpush1.msra.mxu0 %v410
    %414 = vmatprep.subr.mxu0 0.0
    %415 = vmatpush1.msra.mxu0 0.0
    %416 = vmatprep.subr.mxu0 0.0
    %417 = vmatpush1.msra.mxu0 0.0
    %418 = vmatprep.subr.mxu0 0.0
    %419 = vmatpush1.msra.mxu0 0.0
    %420 = vmatprep.subr.mxu0 0.0
    %421 = vmatpush1.msra.mxu0 0.0
    %422 = vmatprep.subr.mxu0 0.0
    %423 = vmatpush1.msra.mxu0 0.0
    %424 = vmatprep.subr.mxu0 0.0
    %425 = vmatpush1.msra.mxu0 0.0
    %426 = vmatprep.subr.mxu0 0.0
    %427 = vmatpush1.msra.mxu0 0.0
    %428 = vmatprep.subr.mxu0 0.0
    %429 = vmatpush1.msra.mxu0 0.0
    %430 = vmatprep.subr.mxu0 0.0
    %431 = vmatpush1.msra.mxu0 0.0
    %432 = vmatprep.subr.mxu0 0.0
    %433 = vmatpush1.msra.mxu0 0.0
    %434 = vmatprep.subr.mxu0 0.0
    %435 = vmatpush1.msra.mxu0 0.0
    %436 = vmatprep.subr.mxu0 0.0
    %437 = vmatpush1.msra.mxu0 0.0
    %438 = vmatprep.subr.mxu0 0.0
    %439 = vmatpush1.msra.mxu0 0.0
    %440 = vmatprep.subr.mxu0 0.0
    %441 = vmatpush1.msra.mxu0 0.0
    %442 = vmatprep.subr.mxu0 0.0
    %443 = vmatpush1.msra.mxu0 0.0
    %444 = vmatprep.subr.mxu0 0.0
    %445 = vmatpush1.msra.mxu0 0.0
    %446 = vmatprep.subr.mxu0 0.0
    %447 = vmatpush1.msra.mxu0 0.0
    %448 = vmatprep.subr.mxu0 0.0
    %449 = vmatpush1.msra.mxu0 0.0
    %450 = vmatprep.subr.mxu0 0.0
    %451 = vmatpush1.msra.mxu0 0.0
    %452 = vmatprep.subr.mxu0 0.0
    %453 = vmatpush1.msra.mxu0 0.0
    %454 = vmatprep.subr.mxu0 0.0
    %455 = vmatpush1.msra.mxu0 0.0
    %456 = vmatprep.subr.mxu0 0.0
    %457 = vmatpush1.msra.mxu0 0.0
    %458 = vmatprep.subr.mxu0 0.0
    %459 = vmatpush1.msra.mxu0 0.0
    %460 = vmatprep.subr.mxu0 0.0
    %461 = vmatpush1.msra.mxu0 0.0
    %462 = vmatprep.subr.mxu0 0.0
    %463 = vmatpush1.msra.mxu0 0.0
    %464 = vmatprep.subr.mxu0 0.0
    %465 = vmatpush1.msra.mxu0 0.0
    %466 = vmatprep.subr.mxu0 0.0
    %467 = vmatpush1.msra.mxu0 0.0
    %468 = vmatprep.subr.mxu0 0.0
    %469 = vmatpush1.msra.mxu0 0.0
    %470 = vmatprep.subr.mxu0 0.0
    %471 = vmatpush1.msra.mxu0 0.0
    %472 = vmatprep.subr.mxu0 0.0
    %473 = vmatpush1.msra.mxu0 0.0
    %474 = vmatprep.subr.mxu0 0.0
    %475 = vmatpush1.msra.mxu0 0.0
    %476 = vmatprep.mubr.f32.mxu0 0.0
    %477 = vmatmul.mubr.f32.gmra.mrb[0].mxu0 %v406
    %v478 = vpop.f32.mrb[0].mxu0
    %v479 = vadd.f32 %v402, %v478
    %v480 = vpop.f32.mrb[0].mxu0
    %481 = vdwg.mxu0
    %v482 = vsub.f32 0.0, %v479
    %v483 = vmul.f32 %v482, 1.442695
    %v484 = vpow.pop %v483
    %v485 = vadd.f32 %v484, 1.0
    %v486 = vrcp.pop %v485
    %v487 = vmul.f32 1.0, %v486
    %v488 = vlaneseq
    %v489 = vshrl.u32 %v488, 7
    %v490 = vsub.s32 0, %v489
    %v491 = vrot.slane %v487, %v490
    %493 = vbcast.lane.b32.xlu0 %v491, 256
    %v494 = vpop.permute.xlu0 %493
    %s496 = sor.u32 256, 8
    %497 = vbcast.lane.b32.xlu0 %v491, %s496
    %v498 = vpop.permute.xlu0 %497
    %v499 = vlaneseq
    %v500 = vshrl.u32 %v499, 7
    %v501 = vsub.s32 1, %v500
    %v502 = vrot.slane %v487, %v501
    %504 = vbcast.lane.b32.xlu0 %v502, 256
    %v505 = vpop.permute.xlu0 %504
    %s507 = sor.u32 256, 8
    %508 = vbcast.lane.b32.xlu0 %v502, %s507
    %v509 = vpop.permute.xlu0 %508
    %v510 = vmul.f32 %v90, %v494
    %v511 = vmul.f32 %v91, %v494
    %v512 = vmul.f32 %v92, %v498
    %v513 = vmul.f32 %v93, %v498
    %v514 = vmul.f32 %v94, %v505
    %v515 = vmul.f32 %v95, %v505
    %v516 = vmul.f32 %v96, %v509
    %v517 = vmul.f32 %v97, %v509
    %v518 = vadd.f32 %v90, %v92
    %v519 = vrot.slane %v518, 4
    %v520 = vadd.f32 %v518, %v519
    %v521 = vrot.slane %v520, 2
    %v522 = vadd.f32 %v520, %v521
    %v523 = vrot.slane %v522, 1
    %v524 = vadd.f32 %v522, %v523
    %v525 = vadd.f32 %v91, %v93
    %v526 = vrot.slane %v525, 4
    %v527 = vadd.f32 %v525, %v526
    %v528 = vrot.slane %v527, 2
    %v529 = vadd.f32 %v527, %v528
    %v530 = vrot.slane %v529, 1
    %v531 = vadd.f32 %v529, %v530
    %v532 = vadd.f32 %v94, %v96
    %v533 = vrot.slane %v532, 4
    %v534 = vadd.f32 %v532, %v533
    %v535 = vrot.slane %v534, 2
    %v536 = vadd.f32 %v534, %v535
    %v537 = vrot.slane %v536, 1
    %v538 = vadd.f32 %v536, %v537
    %v539 = vadd.f32 %v95, %v97
    %v540 = vrot.slane %v539, 4
    %v541 = vadd.f32 %v539, %v540
    %v542 = vrot.slane %v541, 2
    %v543 = vadd.f32 %v541, %v542
    %v544 = vrot.slane %v543, 1
    %v545 = vadd.f32 %v543, %v544
    %v546 = vrcp.pop 16.0
    %v547 = vmul.f32 %v524, %v546
    %v548 = vmul.f32 %v531, %v546
    %v549 = vmul.f32 %v538, %v546
    %v550 = vmul.f32 %v545, %v546
    %v551 = vmax.f32 %v90, %v92
    %v552 = vrot.slane %v551, 4
    %v553 = vmax.f32 %v551, %v552
    %v554 = vrot.slane %v553, 2
    %v555 = vmax.f32 %v553, %v554
    %v556 = vrot.slane %v555, 1
    %v557 = vmax.f32 %v555, %v556
    %v558 = vmax.f32 %v91, %v93
    %v559 = vrot.slane %v558, 4
    %v560 = vmax.f32 %v558, %v559
    %v561 = vrot.slane %v560, 2
    %v562 = vmax.f32 %v560, %v561
    %v563 = vrot.slane %v562, 1
    %v564 = vmax.f32 %v562, %v563
    %v565 = vmax.f32 %v94, %v96
    %v566 = vrot.slane %v565, 4
    %v567 = vmax.f32 %v565, %v566
    %v568 = vrot.slane %v567, 2
    %v569 = vmax.f32 %v567, %v568
    %v570 = vrot.slane %v569, 1
    %v571 = vmax.f32 %v569, %v570
    %v572 = vmax.f32 %v95, %v97
    %v573 = vrot.slane %v572, 4
    %v574 = vmax.f32 %v572, %v573
    %v575 = vrot.slane %v574, 2
    %v576 = vmax.f32 %v574, %v575
    %v577 = vrot.slane %v576, 1
    %v578 = vmax.f32 %v576, %v577
    %v579 = vld [vmem:[#allocation6] sm:$0xff]
    %v580 = vld [vmem:[#allocation6 + $0x8] sm:$0xff]
    %v581 = vld [vmem:[#allocation6 + $0x10] sm:$0xff]
    %v582 = vld [vmem:[#allocation6 + $0x18] sm:$0xff]
    %v583 = vld [vmem:[#allocation6 + $0x20] sm:$0xff]
    %v584 = vld [vmem:[#allocation6 + $0x28] sm:$0xff]
    %v585 = vld [vmem:[#allocation6 + $0x30] sm:$0xff]
    %v586 = vld [vmem:[#allocation6 + $0x38] sm:$0xff]
    %v587 = vld [vmem:[#allocation6 + $0x40] sm:$0xff]
    %v588 = vld [vmem:[#allocation6 + $0x48] sm:$0xff]
    %v589 = vld [vmem:[#allocation6 + $0x50] sm:$0xff]
    %v590 = vld [vmem:[#allocation6 + $0x58] sm:$0xff]
    %v591 = vld [vmem:[#allocation6 + $0x60] sm:$0xff]
    %v592 = vld [vmem:[#allocation6 + $0x68] sm:$0xff]
    %v593 = vld [vmem:[#allocation6 + $0x70] sm:$0xff]
    %v594 = vld [vmem:[#allocation6 + $0x78] sm:$0xff]
    %v595 = vld [vmem:[#allocation6 + $0x80] sm:$0xff]
    %v596 = vld [vmem:[#allocation6 + $0x88] sm:$0xff]
    %v597 = vld [vmem:[#allocation6 + $0x90] sm:$0xff]
    %v598 = vld [vmem:[#allocation6 + $0x98] sm:$0xff]
    %v599 = vld [vmem:[#allocation6 + $0xa0] sm:$0xff]
    %v600 = vld [vmem:[#allocation6 + $0xa8] sm:$0xff]
    %v601 = vld [vmem:[#allocation6 + $0xb0] sm:$0xff]
    %v602 = vld [vmem:[#allocation6 + $0xb8] sm:$0xff]
    %v603 = vld [vmem:[#allocation6 + $0xc0] sm:$0xff]
    %v604 = vld [vmem:[#allocation6 + $0xc8] sm:$0xff]
    %v605 = vld [vmem:[#allocation6 + $0xd0] sm:$0xff]
    %v606 = vld [vmem:[#allocation6 + $0xd8] sm:$0xff]
    %v607 = vld [vmem:[#allocation6 + $0xe0] sm:$0xff]
    %v608 = vld [vmem:[#allocation6 + $0xe8] sm:$0xff]
    %v609 = vld [vmem:[#allocation6 + $0xf0] sm:$0xff]
    %v610 = vld [vmem:[#allocation6 + $0xf8] sm:$0xff]
    %v611 = vld [vmem:[#allocation6 + $0x100] sm:$0xff]
    %v612 = vld [vmem:[#allocation6 + $0x108] sm:$0xff]
    %v613 = vld [vmem:[#allocation6 + $0x110] sm:$0xff]
    %v614 = vld [vmem:[#allocation6 + $0x118] sm:$0xff]
    %v615 = vld [vmem:[#allocation6 + $0x120] sm:$0xff]
    %v616 = vld [vmem:[#allocation6 + $0x128] sm:$0xff]
    %v617 = vld [vmem:[#allocation6 + $0x130] sm:$0xff]
    %v618 = vld [vmem:[#allocation6 + $0x138] sm:$0xff]
    %v619 = vld [vmem:[#allocation6 + $0x140] sm:$0xff]
    %v620 = vld [vmem:[#allocation6 + $0x148] sm:$0xff]
    %v621 = vld [vmem:[#allocation6 + $0x150] sm:$0xff]
    %v622 = vld [vmem:[#allocation6 + $0x158] sm:$0xff]
    %v623 = vld [vmem:[#allocation6 + $0x160] sm:$0xff]
    %v624 = vld [vmem:[#allocation6 + $0x168] sm:$0xff]
    %v625 = vld [vmem:[#allocation6 + $0x170] sm:$0xff]
    %v626 = vld [vmem:[#allocation6 + $0x178] sm:$0xff]
    %v627 = vld [vmem:[#allocation6 + $0x180] sm:$0xff]
    %v628 = vld [vmem:[#allocation6 + $0x188] sm:$0xff]
    %v629 = vld [vmem:[#allocation6 + $0x190] sm:$0xff]
    %v630 = vld [vmem:[#allocation6 + $0x198] sm:$0xff]
    %v631 = vld [vmem:[#allocation6 + $0x1a0] sm:$0xff]
    %v632 = vld [vmem:[#allocation6 + $0x1a8] sm:$0xff]
    %v633 = vld [vmem:[#allocation6 + $0x1b0] sm:$0xff]
    %v634 = vld [vmem:[#allocation6 + $0x1b8] sm:$0xff]
    %v635 = vld [vmem:[#allocation6 + $0x1c0] sm:$0xff]
    %v636 = vld [vmem:[#allocation6 + $0x1c8] sm:$0xff]
    %v637 = vld [vmem:[#allocation6 + $0x1d0] sm:$0xff]
    %v638 = vld [vmem:[#allocation6 + $0x1d8] sm:$0xff]
    %v639 = vld [vmem:[#allocation6 + $0x1e0] sm:$0xff]
    %v640 = vld [vmem:[#allocation6 + $0x1e8] sm:$0xff]
    %v641 = vld [vmem:[#allocation6 + $0x1f0] sm:$0xff]
    %v642 = vld [vmem:[#allocation6 + $0x1f8] sm:$0xff]
    %v643 = vld [vmem:[#allocation7] sm:$0xff]
    %v644 = vld [vmem:[#allocation7 + $0x8] sm:$0xff]
    %v645 = vld [vmem:[#allocation7 + $0x10] sm:$0xff]
    %v646 = vld [vmem:[#allocation7 + $0x18] sm:$0xff]
    %v647 = vld [vmem:[#allocation7 + $0x20] sm:$0xff]
    %v648 = vld [vmem:[#allocation7 + $0x28] sm:$0xff]
    %v649 = vld [vmem:[#allocation7 + $0x30] sm:$0xff]
    %v650 = vld [vmem:[#allocation7 + $0x38] sm:$0xff]
    %v651 = vld [vmem:[#allocation7 + $0x40] sm:$0xff]
    %v652 = vld [vmem:[#allocation7 + $0x48] sm:$0xff]
    %v653 = vld [vmem:[#allocation7 + $0x50] sm:$0xff]
    %v654 = vld [vmem:[#allocation7 + $0x58] sm:$0xff]
    %v655 = vld [vmem:[#allocation7 + $0x60] sm:$0xff]
    %v656 = vld [vmem:[#allocation7 + $0x68] sm:$0xff]
    %v657 = vld [vmem:[#allocation7 + $0x70] sm:$0xff]
    %v658 = vld [vmem:[#allocation7 + $0x78] sm:$0xff]
    %v659 = vld [vmem:[#allocation7 + $0x80] sm:$0xff]
    %v660 = vld [vmem:[#allocation7 + $0x88] sm:$0xff]
    %v661 = vld [vmem:[#allocation7 + $0x90] sm:$0xff]
    %v662 = vld [vmem:[#allocation7 + $0x98] sm:$0xff]
    %v663 = vld [vmem:[#allocation7 + $0xa0] sm:$0xff]
    %v664 = vld [vmem:[#allocation7 + $0xa8] sm:$0xff]
    %v665 = vld [vmem:[#allocation7 + $0xb0] sm:$0xff]
    %v666 = vld [vmem:[#allocation7 + $0xb8] sm:$0xff]
    %v667 = vld [vmem:[#allocation7 + $0xc0] sm:$0xff]
    %v668 = vld [vmem:[#allocation7 + $0xc8] sm:$0xff]
    %v669 = vld [vmem:[#allocation7 + $0xd0] sm:$0xff]
    %v670 = vld [vmem:[#allocation7 + $0xd8] sm:$0xff]
    %v671 = vld [vmem:[#allocation7 + $0xe0] sm:$0xff]
    %v672 = vld [vmem:[#allocation7 + $0xe8] sm:$0xff]
    %v673 = vld [vmem:[#allocation7 + $0xf0] sm:$0xff]
    %v674 = vld [vmem:[#allocation7 + $0xf8] sm:$0xff]
    %v675 = vld [vmem:[#allocation7 + $0x100] sm:$0xff]
    %v676 = vld [vmem:[#allocation7 + $0x108] sm:$0xff]
    %v677 = vld [vmem:[#allocation7 + $0x110] sm:$0xff]
    %v678 = vld [vmem:[#allocation7 + $0x118] sm:$0xff]
    %v679 = vld [vmem:[#allocation7 + $0x120] sm:$0xff]
    %v680 = vld [vmem:[#allocation7 + $0x128] sm:$0xff]
    %v681 = vld [vmem:[#allocation7 + $0x130] sm:$0xff]
    %v682 = vld [vmem:[#allocation7 + $0x138] sm:$0xff]
    %v683 = vld [vmem:[#allocation7 + $0x140] sm:$0xff]
    %v684 = vld [vmem:[#allocation7 + $0x148] sm:$0xff]
    %v685 = vld [vmem:[#allocation7 + $0x150] sm:$0xff]
    %v686 = vld [vmem:[#allocation7 + $0x158] sm:$0xff]
    %v687 = vld [vmem:[#allocation7 + $0x160] sm:$0xff]
    %v688 = vld [vmem:[#allocation7 + $0x168] sm:$0xff]
    %v689 = vld [vmem:[#allocation7 + $0x170] sm:$0xff]
    %v690 = vld [vmem:[#allocation7 + $0x178] sm:$0xff]
    %v691 = vld [vmem:[#allocation7 + $0x180] sm:$0xff]
    %v692 = vld [vmem:[#allocation7 + $0x188] sm:$0xff]
    %v693 = vld [vmem:[#allocation7 + $0x190] sm:$0xff]
    %v694 = vld [vmem:[#allocation7 + $0x198] sm:$0xff]
    %v695 = vld [vmem:[#allocation7 + $0x1a0] sm:$0xff]
    %v696 = vld [vmem:[#allocation7 + $0x1a8] sm:$0xff]
    %v697 = vld [vmem:[#allocation7 + $0x1b0] sm:$0xff]
    %v698 = vld [vmem:[#allocation7 + $0x1b8] sm:$0xff]
    %v699 = vld [vmem:[#allocation7 + $0x1c0] sm:$0xff]
    %v700 = vld [vmem:[#allocation7 + $0x1c8] sm:$0xff]
    %v701 = vld [vmem:[#allocation7 + $0x1d0] sm:$0xff]
    %v702 = vld [vmem:[#allocation7 + $0x1d8] sm:$0xff]
    %v703 = vld [vmem:[#allocation7 + $0x1e0] sm:$0xff]
    %v704 = vld [vmem:[#allocation7 + $0x1e8] sm:$0xff]
    %v705 = vld [vmem:[#allocation7 + $0x1f0] sm:$0xff]
    %v706 = vld [vmem:[#allocation7 + $0x1f8] sm:$0xff]
    %v711 = vsel %vm320, %v571, %v557
    %v712 = vsel %vm320, %v578, %v564
    %715 = vmatprep.subr.mxu0 %v644
    %716 = vmatpush1.msra.mxu0 %v643
    %717 = vmatprep.subr.mxu0 %v646
    %718 = vmatpush1.msra.mxu0 %v645
    %719 = vmatprep.subr.mxu0 %v648
    %720 = vmatpush1.msra.mxu0 %v647
    %721 = vmatprep.subr.mxu0 %v650
    %722 = vmatpush1.msra.mxu0 %v649
    %723 = vmatprep.subr.mxu0 %v652
    %724 = vmatpush1.msra.mxu0 %v651
    %725 = vmatprep.subr.mxu0 %v654
    %726 = vmatpush1.msra.mxu0 %v653
    %727 = vmatprep.subr.mxu0 %v656
    %728 = vmatpush1.msra.mxu0 %v655
    %729 = vmatprep.subr.mxu0 %v658
    %730 = vmatpush1.msra.mxu0 %v657
    %731 = vmatprep.subr.mxu0 %v660
    %732 = vmatpush1.msra.mxu0 %v659
    %733 = vmatprep.subr.mxu0 %v662
    %734 = vmatpush1.msra.mxu0 %v661
    %735 = vmatprep.subr.mxu0 %v664
    %736 = vmatpush1.msra.mxu0 %v663
    %737 = vmatprep.subr.mxu0 %v666
    %738 = vmatpush1.msra.mxu0 %v665
    %739 = vmatprep.subr.mxu0 %v668
    %740 = vmatpush1.msra.mxu0 %v667
    %741 = vmatprep.subr.mxu0 %v670
    %742 = vmatpush1.msra.mxu0 %v669
    %743 = vmatprep.subr.mxu0 %v672
    %744 = vmatpush1.msra.mxu0 %v671
    %745 = vmatprep.subr.mxu0 %v674
    %746 = vmatpush1.msra.mxu0 %v673
    %747 = vmatprep.subr.mxu0 %v676
    %748 = vmatpush1.msra.mxu0 %v675
    %749 = vmatprep.subr.mxu0 %v678
    %750 = vmatpush1.msra.mxu0 %v677
    %751 = vmatprep.subr.mxu0 %v680
    %752 = vmatpush1.msra.mxu0 %v679
    %753 = vmatprep.subr.mxu0 %v682
    %754 = vmatpush1.msra.mxu0 %v681
    %755 = vmatprep.subr.mxu0 %v684
    %756 = vmatpush1.msra.mxu0 %v683
    %757 = vmatprep.subr.mxu0 %v686
    %758 = vmatpush1.msra.mxu0 %v685
    %759 = vmatprep.subr.mxu0 %v688
    %760 = vmatpush1.msra.mxu0 %v687
    %761 = vmatprep.subr.mxu0 %v690
    %762 = vmatpush1.msra.mxu0 %v689
    %763 = vmatprep.subr.mxu0 %v692
    %764 = vmatpush1.msra.mxu0 %v691
    %765 = vmatprep.subr.mxu0 %v694
    %766 = vmatpush1.msra.mxu0 %v693
    %767 = vmatprep.subr.mxu0 %v696
    %768 = vmatpush1.msra.mxu0 %v695
    %769 = vmatprep.subr.mxu0 %v698
    %770 = vmatpush1.msra.mxu0 %v697
    %771 = vmatprep.subr.mxu0 %v700
    %772 = vmatpush1.msra.mxu0 %v699
    %773 = vmatprep.subr.mxu0 %v702
    %774 = vmatpush1.msra.mxu0 %v701
    %775 = vmatprep.subr.mxu0 %v704
    %776 = vmatpush1.msra.mxu0 %v703
    %777 = vmatprep.subr.mxu0 %v706
    %778 = vmatpush1.msra.mxu0 %v705
    %779 = vmatprep.mubr.f32.mxu0 %v712
    %780 = vmatmul.mubr.f32.gmra.mrb[0].mxu0 %v711
    %v781 = vpop.f32.mrb[0].mxu0
    %v782 = vadd.f32 0.0, %v781
    %v783 = vpop.f32.mrb[0].mxu0
    %v784 = vadd.f32 0.0, %v783
    %785 = vdwg.mxu0
    %v790 = vsel %vm320, %v549, %v547
    %v791 = vsel %vm320, %v550, %v548
    %794 = vmatprep.subr.mxu0 %v580
    %795 = vmatpush1.msra.mxu0 %v579
    %796 = vmatprep.subr.mxu0 %v582
    %797 = vmatpush1.msra.mxu0 %v581
    %798 = vmatprep.subr.mxu0 %v584
    %799 = vmatpush1.msra.mxu0 %v583
    %800 = vmatprep.subr.mxu0 %v586
    %801 = vmatpush1.msra.mxu0 %v585
    %802 = vmatprep.subr.mxu0 %v588
    %803 = vmatpush1.msra.mxu0 %v587
    %804 = vmatprep.subr.mxu0 %v590
    %805 = vmatpush1.msra.mxu0 %v589
    %806 = vmatprep.subr.mxu0 %v592
    %807 = vmatpush1.msra.mxu0 %v591
    %808 = vmatprep.subr.mxu0 %v594
    %809 = vmatpush1.msra.mxu0 %v593
    %810 = vmatprep.subr.mxu0 %v596
    %811 = vmatpush1.msra.mxu0 %v595
    %812 = vmatprep.subr.mxu0 %v598
    %813 = vmatpush1.msra.mxu0 %v597
    %814 = vmatprep.subr.mxu0 %v600
    %815 = vmatpush1.msra.mxu0 %v599
    %816 = vmatprep.subr.mxu0 %v602
    %817 = vmatpush1.msra.mxu0 %v601
    %818 = vmatprep.subr.mxu0 %v604
    %819 = vmatpush1.msra.mxu0 %v603
    %820 = vmatprep.subr.mxu0 %v606
    %821 = vmatpush1.msra.mxu0 %v605
    %822 = vmatprep.subr.mxu0 %v608
    %823 = vmatpush1.msra.mxu0 %v607
    %824 = vmatprep.subr.mxu0 %v610
    %825 = vmatpush1.msra.mxu0 %v609
    %826 = vmatprep.subr.mxu0 %v612
    %827 = vmatpush1.msra.mxu0 %v611
    %828 = vmatprep.subr.mxu0 %v614
    %829 = vmatpush1.msra.mxu0 %v613
    %830 = vmatprep.subr.mxu0 %v616
    %831 = vmatpush1.msra.mxu0 %v615
    %832 = vmatprep.subr.mxu0 %v618
    %833 = vmatpush1.msra.mxu0 %v617
    %834 = vmatprep.subr.mxu0 %v620
    %835 = vmatpush1.msra.mxu0 %v619
    %836 = vmatprep.subr.mxu0 %v622
    %837 = vmatpush1.msra.mxu0 %v621
    %838 = vmatprep.subr.mxu0 %v624
    %839 = vmatpush1.msra.mxu0 %v623
    %840 = vmatprep.subr.mxu0 %v626
    %841 = vmatpush1.msra.mxu0 %v625
    %842 = vmatprep.subr.mxu0 %v628
    %843 = vmatpush1.msra.mxu0 %v627
    %844 = vmatprep.subr.mxu0 %v630
    %845 = vmatpush1.msra.mxu0 %v629
    %846 = vmatprep.subr.mxu0 %v632
    %847 = vmatpush1.msra.mxu0 %v631
    %848 = vmatprep.subr.mxu0 %v634
    %849 = vmatpush1.msra.mxu0 %v633
    %850 = vmatprep.subr.mxu0 %v636
    %851 = vmatpush1.msra.mxu0 %v635
    %852 = vmatprep.subr.mxu0 %v638
    %853 = vmatpush1.msra.mxu0 %v637
    %854 = vmatprep.subr.mxu0 %v640
    %855 = vmatpush1.msra.mxu0 %v639
    %856 = vmatprep.subr.mxu0 %v642
    %857 = vmatpush1.msra.mxu0 %v641
    %858 = vmatprep.mubr.f32.mxu0 %v791
    %859 = vmatmul.mubr.f32.gmra.mrb[0].mxu0 %v790
    %v860 = vpop.f32.mrb[0].mxu0
    %v861 = vadd.f32 %v782, %v860
    %v862 = vpop.f32.mrb[0].mxu0
    %v863 = vadd.f32 %v784, %v862
    %864 = vdwg.mxu0
    %v865 = vstv %s89
    %v866 = vadd.f32 %v861, %v865
    %v867 = vadd.f32 %v863, %v865
    %v868 = vsub.f32 0.0, %v866
    %v869 = vsub.f32 0.0, %v867
    %v870 = vmul.f32 %v868, 1.442695
    %v871 = vpow.pop %v870
    %v872 = vmul.f32 %v869, 1.442695
    %v873 = vpow.pop %v872
    %v874 = vadd.f32 %v871, 1.0
    %v875 = vadd.f32 %v873, 1.0
    %v876 = vrcp.pop %v874
    %v877 = vmul.f32 1.0, %v876
    %v878 = vrcp.pop %v875
    %v879 = vmul.f32 1.0, %v878
    %v882 = vcombine.low %v877, %v879
    %v884 = vunpack.c.l.s4 1966171168
    %v885 = vunpack.c.0.s8 %v884
    %v886 = vlaneseq
    %v887 = vshrl.u32 %v886, 7
    %v888 = vsub.s32 %v885, %v887
    %v889 = vrot.slane %v882, %v888
    %v890 = vcombine.high %v889, %v889
    %v892 = vunpack.c.l.s4 1966171168
    %v893 = vunpack.c.0.s8 %v892
    %v894 = vlaneseq
    %v895 = vshrl.u32 %v894, 7
    %v896 = vsub.s32 %v893, %v895
    %v897 = vrot.slane %v889, %v896
    %v899 = vunpack.c.l.s4 1966171168
    %v900 = vunpack.c.0.s8 %v899
    %v901 = vlaneseq
    %v902 = vshrl.u32 %v901, 7
    %v903 = vsub.s32 %v900, %v902
    %v904 = vrot.slane %v890, %v903
    %v905 = vlaneseq
    %v906 = vshrl.u32 %v905, 7
    %v907 = vsub.s32 0, %v906
    %v908 = vrot.slane %v897, %v907
    %v909 = vlaneseq
    %v910 = vshrl.u32 %v909, 7
    %v911 = vsub.s32 1, %v910
    %v912 = vrot.slane %v897, %v911
    %v913 = vlaneseq
    %v914 = vshrl.u32 %v913, 7
    %v915 = vsub.s32 0, %v914
    %v916 = vrot.slane %v904, %v915
    %v917 = vlaneseq
    %v918 = vshrl.u32 %v917, 7
    %v919 = vsub.s32 1, %v918
    %v920 = vrot.slane %v904, %v919
    %v925 = vmul.f32 %v510, %v908
    %v926 = vmul.f32 %v511, %v912
    %v927 = vmul.f32 %v512, %v908
    %v928 = vmul.f32 %v513, %v912
    %v929 = vmul.f32 %v514, %v916
    %v930 = vmul.f32 %v515, %v920
    %v931 = vmul.f32 %v516, %v916
    %v932 = vmul.f32 %v517, %v920
    %v933 = vstv %s87
    %v934 = vmul.f32 %v933, %v925
    %v935 = vmul.f32 %v933, %v926
    %v936 = vmul.f32 %v933, %v927
    %v937 = vmul.f32 %v933, %v928
    %v938 = vmul.f32 %v933, %v929
    %v939 = vmul.f32 %v933, %v930
    %v940 = vmul.f32 %v933, %v931
    %v941 = vmul.f32 %v933, %v932
    %v942 = vadd.f32 %v90, %v934
    %v943 = vadd.f32 %v91, %v935
    %v944 = vadd.f32 %v92, %v936
    %v945 = vadd.f32 %v93, %v937
    %v946 = vadd.f32 %v94, %v938
    %v947 = vadd.f32 %v95, %v939
    %v948 = vadd.f32 %v96, %v940
    %v949 = vadd.f32 %v97, %v941
    %s950 = ssub.f32 0.0, %s88
    %v951 = vstv %s950
    %v952 = vmul.f32 %v951, 1.442695
    %v953 = vpow.pop %v952
    %s954 = vtos %v953
    %s955 = sadd.f32 %s954, 1.0
    %v956 = vstv %s955
    %v957 = vrcp.pop %v956
    %s958 = vtos %v957
    %v959 = vstv %s958
    %v960 = vmul.f32 %v959, %v942
    %v961 = vmul.f32 %v959, %v943
    %v962 = vmul.f32 %v959, %v944
    %v963 = vmul.f32 %v959, %v945
    %v964 = vmul.f32 %v959, %v946
    %v965 = vmul.f32 %v959, %v947
    %v966 = vmul.f32 %v959, %v948
    %v967 = vmul.f32 %v959, %v949
    %s968 = ssub.f32 1.0, %s958
    %v969 = vstv %s968
    %v970 = vmul.f32 %v969, %v260
    %v971 = vmul.f32 %v969, %v261
    %v972 = vmul.f32 %v969, %v262
    %v973 = vmul.f32 %v969, %v263
    %v974 = vmul.f32 %v969, %v264
    %v975 = vmul.f32 %v969, %v265
    %v976 = vmul.f32 %v969, %v266
    %v977 = vmul.f32 %v969, %v267
    %v978 = vadd.f32 %v960, %v970
    %v979 = vadd.f32 %v961, %v971
    %v980 = vadd.f32 %v962, %v972
    %v981 = vadd.f32 %v963, %v973
    %v982 = vadd.f32 %v964, %v974
    %v983 = vadd.f32 %v965, %v975
    %v984 = vadd.f32 %v966, %v976
    %v985 = vadd.f32 %v967, %v977
    %v986 = vadd.f32 %v978, %v979
    %987 = vadd.xlane.f32.xlu0 %v986
    %v988 = vpop.xlane.xlu0 %987
    %v989 = vadd.f32 %v980, %v981
    %990 = vadd.xlane.f32.xlu0 %v989
    %v991 = vpop.xlane.xlu0 %990
    %v992 = vadd.f32 %v982, %v983
    %993 = vadd.xlane.f32.xlu0 %v992
    %v994 = vpop.xlane.xlu0 %993
    %v995 = vadd.f32 %v984, %v985
    %996 = vadd.xlane.f32.xlu0 %v995
    %v997 = vpop.xlane.xlu0 %996
    %v998 = vmul.f32 %v988, %v280
    %v999 = vmul.f32 %v991, %v280
    %v1000 = vmul.f32 %v994, %v280
    %v1001 = vmul.f32 %v997, %v280
    %v1002 = vld [vmem:[%s9] sm:$0xff]
    %v1003 = vld [vmem:[%s9 + $0x8] sm:$0xff]
    %v1004 = vld [vmem:[%s10] sm:$0x1]
    %v1006 = vlaneseq
    %v1007 = vshrl.u32 %v1006, 7
    %v1008 = vsub.s32 0, %v1007
    %v1009 = vrot.slane %v1004, %v1008
    %v1015 = vlaneseq
    %v1016 = vshrl.u32 %v1015, 7
    %v1017 = vsub.s32 %v299, %v1016
    %v1018 = vrot.slane %v998, %v1017
    %v1019 = vlaneseq
    %v1020 = vshrl.u32 %v1019, 7
    %v1021 = vsub.s32 %v304, %v1020
    %v1022 = vrot.slane %v999, %v1021
    %v1023 = vsel %vm309, %v1022, %v1018
    %v1024 = vlaneseq
    %v1025 = vshrl.u32 %v1024, 7
    %v1026 = vsub.s32 %v299, %v1025
    %v1027 = vrot.slane %v1000, %v1026
    %v1028 = vlaneseq
    %v1029 = vshrl.u32 %v1028, 7
    %v1030 = vsub.s32 %v304, %v1029
    %v1031 = vrot.slane %v1001, %v1030
    %v1032 = vsel %vm309, %v1031, %v1027
    %v1033 = vsel %vm320, %v1032, %v1023
    %v1034 = vsel %vm322, %v1033, 0
    %1036 = vmatprep.subr.mxu0 0.0
    %1037 = vmatpush1.msra.mxu0 %v1002
    %1038 = vmatprep.subr.mxu0 0.0
    %1039 = vmatpush1.msra.mxu0 %v1003
    %1040 = vmatprep.subr.mxu0 0.0
    %1041 = vmatpush1.msra.mxu0 0.0
    %1042 = vmatprep.subr.mxu0 0.0
    %1043 = vmatpush1.msra.mxu0 0.0
    %1044 = vmatprep.subr.mxu0 0.0
    %1045 = vmatpush1.msra.mxu0 0.0
    %1046 = vmatprep.subr.mxu0 0.0
    %1047 = vmatpush1.msra.mxu0 0.0
    %1048 = vmatprep.subr.mxu0 0.0
    %1049 = vmatpush1.msra.mxu0 0.0
    %1050 = vmatprep.subr.mxu0 0.0
    %1051 = vmatpush1.msra.mxu0 0.0
    %1052 = vmatprep.subr.mxu0 0.0
    %1053 = vmatpush1.msra.mxu0 0.0
    %1054 = vmatprep.subr.mxu0 0.0
    %1055 = vmatpush1.msra.mxu0 0.0
    %1056 = vmatprep.subr.mxu0 0.0
    %1057 = vmatpush1.msra.mxu0 0.0
    %1058 = vmatprep.subr.mxu0 0.0
    %1059 = vmatpush1.msra.mxu0 0.0
    %1060 = vmatprep.subr.mxu0 0.0
    %1061 = vmatpush1.msra.mxu0 0.0
    %1062 = vmatprep.subr.mxu0 0.0
    %1063 = vmatpush1.msra.mxu0 0.0
    %1064 = vmatprep.subr.mxu0 0.0
    %1065 = vmatpush1.msra.mxu0 0.0
    %1066 = vmatprep.subr.mxu0 0.0
    %1067 = vmatpush1.msra.mxu0 0.0
    %1068 = vmatprep.subr.mxu0 0.0
    %1069 = vmatpush1.msra.mxu0 0.0
    %1070 = vmatprep.subr.mxu0 0.0
    %1071 = vmatpush1.msra.mxu0 0.0
    %1072 = vmatprep.subr.mxu0 0.0
    %1073 = vmatpush1.msra.mxu0 0.0
    %1074 = vmatprep.subr.mxu0 0.0
    %1075 = vmatpush1.msra.mxu0 0.0
    %1076 = vmatprep.subr.mxu0 0.0
    %1077 = vmatpush1.msra.mxu0 0.0
    %1078 = vmatprep.subr.mxu0 0.0
    %1079 = vmatpush1.msra.mxu0 0.0
    %1080 = vmatprep.subr.mxu0 0.0
    %1081 = vmatpush1.msra.mxu0 0.0
    %1082 = vmatprep.subr.mxu0 0.0
    %1083 = vmatpush1.msra.mxu0 0.0
    %1084 = vmatprep.subr.mxu0 0.0
    %1085 = vmatpush1.msra.mxu0 0.0
    %1086 = vmatprep.subr.mxu0 0.0
    %1087 = vmatpush1.msra.mxu0 0.0
    %1088 = vmatprep.subr.mxu0 0.0
    %1089 = vmatpush1.msra.mxu0 0.0
    %1090 = vmatprep.subr.mxu0 0.0
    %1091 = vmatpush1.msra.mxu0 0.0
    %1092 = vmatprep.subr.mxu0 0.0
    %1093 = vmatpush1.msra.mxu0 0.0
    %1094 = vmatprep.subr.mxu0 0.0
    %1095 = vmatpush1.msra.mxu0 0.0
    %1096 = vmatprep.subr.mxu0 0.0
    %1097 = vmatpush1.msra.mxu0 0.0
    %1098 = vmatprep.subr.mxu0 0.0
    %1099 = vmatpush1.msra.mxu0 0.0
    %1100 = vmatprep.mubr.f32.mxu0 0.0
    %1101 = vmatmul.mubr.f32.gmra.mrb[0].mxu0 %v1034
    %v1102 = vpop.f32.mrb[0].mxu0
    %v1103 = vadd.f32 %v1009, %v1102
    %v1104 = vpop.f32.mrb[0].mxu0
    %1105 = vdwg.mxu0
    %v1106 = vadd.f32 %v1103, 3.0
    %v1107 = vmax.f32 %v1106, 0.0
    %v1108 = vmin.f32 %v1107, 6.0
    %v1109 = vmul.f32 %v1103, %v1108
    %v1110 = vmul.f32 %v1109, 0.16666667
    %v1111 = vld [vmem:[%s11] sm:$0xff]
    %v1112 = vld [vmem:[%s11 + $0x8] sm:$0xff]
    %v1113 = vld [vmem:[%s11 + $0x10] sm:$0xff]
    %v1114 = vld [vmem:[%s11 + $0x18] sm:$0xff]
    %v1115 = vld [vmem:[%s12] sm:$0x1]
    %v1117 = vlaneseq
    %v1118 = vshrl.u32 %v1117, 7
    %v1119 = vsub.s32 0, %v1118
    %v1120 = vrot.slane %v1115, %v1119
    %vm1122 = vcmask 261120
    %v1124 = vsel %vm1122, %v1110, 0
    %1126 = vmatprep.subr.mxu0 0.0
    %1127 = vmatpush1.msra.mxu0 %v1111
    %1128 = vmatprep.subr.mxu0 0.0
    %1129 = vmatpush1.msra.mxu0 %v1112
    %1130 = vmatprep.subr.mxu0 0.0
    %1131 = vmatpush1.msra.mxu0 %v1113
    %1132 = vmatprep.subr.mxu0 0.0
    %1133 = vmatpush1.msra.mxu0 %v1114
    %1134 = vmatprep.subr.mxu0 0.0
    %1135 = vmatpush1.msra.mxu0 0.0
    %1136 = vmatprep.subr.mxu0 0.0
    %1137 = vmatpush1.msra.mxu0 0.0
    %1138 = vmatprep.subr.mxu0 0.0
    %1139 = vmatpush1.msra.mxu0 0.0
    %1140 = vmatprep.subr.mxu0 0.0
    %1141 = vmatpush1.msra.mxu0 0.0
    %1142 = vmatprep.subr.mxu0 0.0
    %1143 = vmatpush1.msra.mxu0 0.0
    %1144 = vmatprep.subr.mxu0 0.0
    %1145 = vmatpush1.msra.mxu0 0.0
    %1146 = vmatprep.subr.mxu0 0.0
    %1147 = vmatpush1.msra.mxu0 0.0
    %1148 = vmatprep.subr.mxu0 0.0
    %1149 = vmatpush1.msra.mxu0 0.0
    %1150 = vmatprep.subr.mxu0 0.0
    %1151 = vmatpush1.msra.mxu0 0.0
    %1152 = vmatprep.subr.mxu0 0.0
    %1153 = vmatpush1.msra.mxu0 0.0
    %1154 = vmatprep.subr.mxu0 0.0
    %1155 = vmatpush1.msra.mxu0 0.0
    %1156 = vmatprep.subr.mxu0 0.0
    %1157 = vmatpush1.msra.mxu0 0.0
    %1158 = vmatprep.subr.mxu0 0.0
    %1159 = vmatpush1.msra.mxu0 0.0
    %1160 = vmatprep.subr.mxu0 0.0
    %1161 = vmatpush1.msra.mxu0 0.0
    %1162 = vmatprep.subr.mxu0 0.0
    %1163 = vmatpush1.msra.mxu0 0.0
    %1164 = vmatprep.subr.mxu0 0.0
    %1165 = vmatpush1.msra.mxu0 0.0
    %1166 = vmatprep.subr.mxu0 0.0
    %1167 = vmatpush1.msra.mxu0 0.0
    %1168 = vmatprep.subr.mxu0 0.0
    %1169 = vmatpush1.msra.mxu0 0.0
    %1170 = vmatprep.subr.mxu0 0.0
    %1171 = vmatpush1.msra.mxu0 0.0
    %1172 = vmatprep.subr.mxu0 0.0
    %1173 = vmatpush1.msra.mxu0 0.0
    %1174 = vmatprep.subr.mxu0 0.0
    %1175 = vmatpush1.msra.mxu0 0.0
    %1176 = vmatprep.subr.mxu0 0.0
    %1177 = vmatpush1.msra.mxu0 0.0
    %1178 = vmatprep.subr.mxu0 0.0
    %1179 = vmatpush1.msra.mxu0 0.0
    %1180 = vmatprep.subr.mxu0 0.0
    %1181 = vmatpush1.msra.mxu0 0.0
    %1182 = vmatprep.subr.mxu0 0.0
    %1183 = vmatpush1.msra.mxu0 0.0
    %1184 = vmatprep.subr.mxu0 0.0
    %1185 = vmatpush1.msra.mxu0 0.0
    %1186 = vmatprep.subr.mxu0 0.0
    %1187 = vmatpush1.msra.mxu0 0.0
    %1188 = vmatprep.subr.mxu0 0.0
    %1189 = vmatpush1.msra.mxu0 0.0
    %1190 = vmatprep.mubr.f32.mxu0 0.0
    %1191 = vmatmul.mubr.f32.gmra.mrb[0].mxu0 %v1124
    %v1192 = vpop.f32.mrb[0].mxu0
    %v1193 = vadd.f32 %v1120, %v1192
    %v1194 = vpop.f32.mrb[0].mxu0
    %1195 = vdwg.mxu0
    %vm1196 = vcmask 74752
    %1197 = vst.msk [vmem:[#allocation9] sm:$0x3] %vm1196, %v1193
    // Predicated region
    $region66: #{bio_inspired_cnn_forward.1} parent=1 // pred_check
      _
    $region67: #{bio_inspired_cnn_forward.1} parent=1 // pred_check_branch
      %1199 = sbr.rel (0) target = $region69
    $region68: #{bio_inspired_cnn_forward.1} parent=1 // pred_region
      %s1201 = ssub.s32 32, 32
      %1202 = vsyncadd [#allocation4], %s1201
      %s1204 = sshll.u32 [#allocation9], 4
      %s1205 = int_to_ptr.vmem [resolvable:$true] %s1204
      %1207 = dma.vmem_to_hbm [thread:$0]  %s1205, 32, %s13, [#allocation4]
    $region69: #{bio_inspired_cnn_forward.1} parent=1 // pred_fallthru
      _
    // Predicated region
    $region70: #{bio_inspired_cnn_forward.1} parent=1 // pred_check
      _
    $region71: #{bio_inspired_cnn_forward.1} parent=1 // pred_check_branch
      %1209 = sbr.rel (0) target = $region73
    $region72: #{bio_inspired_cnn_forward.1} parent=1 // pred_region
      %1210 = dma.done [#allocation4], 32
    $region73: #{bio_inspired_cnn_forward.1} parent=1 // pred_fallthru
      _
    %1211 = vsyncpa [#allocation3], 1
    %1212 = vsyncpa [#allocation8], 1
    %1213 = vsyncpa [#allocation4], 1
    %1214 = vsyncpa [#allocation5], 1

</llo_original>
